<compile_context>
chip_gen: v6e
topology: v6e:2x2x1
jax: 0.10.0
libtpu: 0.0.40
codegen_flags: <defaults>
</compile_context>

<pallas_src>
import math

import jax
import jax.numpy as jnp
from jax import lax
from jax.experimental import pallas as pl
from jax.experimental.pallas import tpu as pltpu


def _make_mha_flash_kernel(n_heads, d_k, d_v):
    scale = 1.0 / math.sqrt(d_k)

    def kernel(q_ref, k_ref, v_ref, o_ref, m_sc, l_sc, acc_sc):
        # q_ref: [tq, H*d_k], k_ref: [tk, H*d_k], v_ref: [tk, H*d_v], o_ref: [tq, H*d_v]
        kv = pl.program_id(2)

        @pl.when(kv == 0)
        def _init():
            m_sc[...] = jnp.full_like(m_sc, -jnp.inf)
            l_sc[...] = jnp.zeros_like(l_sc)
            acc_sc[...] = jnp.zeros_like(acc_sc)

        # Hoisted scale: one broadcast-multiply on the whole [tq, H*d_k] tile.
        q = q_ref[...] * scale
        k = k_ref[...]
        v = v_ref[...]

        for h in range(n_heads):
            # Static lane slices: head split happens in VMEM, not in HBM.
            qh = q[:, h * d_k:(h + 1) * d_k]
            kh = k[:, h * d_k:(h + 1) * d_k]
            vh = v[:, h * d_v:(h + 1) * d_v]

            # similarity = (Q * 1/sqrt(d_k)) . K^T, contracting last dims (no k.T).
            s = lax.dot_general(
                qh, kh,
                dimension_numbers=(((1,), (1,)), ((), ())),
                preferred_element_type=jnp.float32,
            )                                               # [tq, tk] f32

            # Online softmax update for this head.
            m_prev = m_sc[h]                                # [tq, 1]
            m_new = jnp.maximum(m_prev, jnp.max(s, axis=-1, keepdims=True))
            alpha = jnp.exp(m_prev - m_new)
            p = jnp.exp(s - m_new)
            l_sc[h] = alpha * l_sc[h] + jnp.sum(p, axis=-1, keepdims=True)
            acc_sc[h] = alpha * acc_sc[h] + jnp.dot(
                p.astype(v.dtype), vh, preferred_element_type=jnp.float32)
            m_sc[h] = m_new

        @pl.when(kv == pl.num_programs(2) - 1)
        def _finalize():
            # Per-head direct lane-slice stores: no concat epilogue, stores spread
            # across the head loop so they hide under MXU work.
            for h in range(n_heads):
                inv_l = pl.reciprocal(l_sc[h], approx=True)
                o_ref[:, h * d_v:(h + 1) * d_v] = (acc_sc[h] * inv_l).astype(o_ref.dtype)

    return kernel


def _pick_tile(n, candidates):
    """Largest candidate tile that evenly divides n; otherwise the full extent."""
    for c in candidates:
        if n % c == 0:
            return c
    return n


def _pad_to(n, m):
    return -(-n // m) * m


def multi_head_projection(inputs, n_heads, mask=None, *, q_tile=None, kv_tile=None):
    """JAX/Pallas equivalent of MultiHeadProjection.forward.

    inputs = (queries, keys, values), each [batch, seq, depth].
    Returns [batch, n_queries, depth_v].
    """
    if mask is not None:
        # TODO(synk): ApplyAttentionMask not defined in the reference source.
        raise NotImplementedError("mask is not supported; only mask=None path")

    queries, keys, values = inputs
    B, Lq, Dk = queries.shape
    _, Lk, Dk2 = keys.shape
    _, Lk2, Dv = values.shape
    assert Dk == Dk2 and Lk == Lk2
    assert Dk % n_heads == 0 and Dv % n_heads == 0, \
        "Shape of feature input must be divisible by n_heads"
    d_k = Dk // n_heads
    d_v = Dv // n_heads

    out_dtype = jnp.promote_types(queries.dtype, values.dtype)

    # Lq / KV tiles: bound the f32 score matrix and the Q/O tiles; amortize the
    # ~0.35 us per-grid-step overhead with still-large DMAs.
    tq = q_tile if q_tile is not None else _pick_tile(Lq, (512, 256, 128))
    tk = kv_tile if kv_tile is not None else _pick_tile(Lk, (512, 256, 128))
    assert Lq % tq == 0 and Lk % tk == 0
    assert tq == Lq or tq % 8 == 0
    assert tk == Lk or tk % 8 == 0

    kernel = _make_mha_flash_kernel(n_heads, d_k, d_v)

    grid = (B, Lq // tq, Lk // tk)

    grid_spec = pltpu.PrefetchScalarGridSpec(
        num_scalar_prefetch=0,
        grid=grid,
        in_specs=[
            pl.BlockSpec((pl.Squeezed(), tq, Dk), lambda b, i, j: (b, i, 0)),
            pl.BlockSpec((pl.Squeezed(), tk, Dk), lambda b, i, j: (b, j, 0)),
            pl.BlockSpec((pl.Squeezed(), tk, Dv), lambda b, i, j: (b, j, 0)),
        ],
        # Output block index is constant along the KV axis -> output (and the online
        # softmax scratch) stays resident across the whole KV reduction.
        out_specs=pl.BlockSpec((pl.Squeezed(), tq, Dv), lambda b, i, j: (b, i, 0)),
        scratch_shapes=[
            pltpu.VMEM((n_heads, tq, 1), jnp.float32),     # running max m
            pltpu.VMEM((n_heads, tq, 1), jnp.float32),     # running denom l
            pltpu.VMEM((n_heads, tq, d_v), jnp.float32),   # running PV accumulator
        ],
    )

    itemsize = jnp.dtype(queries.dtype).itemsize
    # Advisory cost estimate so XLA schedules surrounding ops (e.g. QKV projections)
    # around the kernel correctly.
    cost = pl.CostEstimate(
        flops=2 * B * Lq * Lk * (Dk + Dv),
        transcendentals=B * n_heads * Lq * Lk,
        bytes_accessed=(B * Lq * Dk + B * Lk * Dk + B * Lk * Dv + B * Lq * Dv) * itemsize,
    )

    # VMEM budget: double-buffered Q/K/V/O tiles + online-softmax scratch + per-head
    # f32 S matrix, with 2x headroom; clamp to [32 MiB, 48 MiB] so we raise v5e's
    # 16 MiB scoped default but stay safely under v7x's 64 MiB physical VMEM.
    tile_bytes = 2 * itemsize * (
        tq * _pad_to(Dk, 128) + tk * _pad_to(Dk, 128)
        + tk * _pad_to(Dv, 128) + tq * _pad_to(Dv, 128))
    scratch_bytes = 4 * n_heads * _pad_to(tq, 8) * (2 * 128 + _pad_to(d_v, 128))
    s_bytes = 4 * _pad_to(tq, 8) * _pad_to(tk, 128)
    vmem_limit = int(min(max(2 * (tile_bytes + scratch_bytes + s_bytes), 32 << 20),
                         48 << 20))

    return pl.pallas_call(
        kernel,
        out_shape=jax.ShapeDtypeStruct((B, Lq, Dv), out_dtype),
        grid_spec=grid_spec,
        compiler_params=pltpu.CompilerParams(
            dimension_semantics=("parallel", "parallel", "arbitrary"),
            vmem_limit_bytes=vmem_limit,
        ),
        cost_estimate=cost,
    )(queries, keys, values)


def _reference(q, k, v, n_heads):
    """Pure-JAX mirror of the PyTorch module's split/attend/combine."""
    def split(t):
        b, l, d = t.shape
        return jnp.transpose(t.reshape(b, l, n_heads, d // n_heads), (0, 2, 1, 3))
    qs, ks, vs = split(q), split(k), split(v)
    s = jnp.einsum("bhqd,bhkd->bhqk", qs, ks) / jnp.sqrt(jnp.float32(ks.shape[-1]))
    w = jax.nn.softmax(s, axis=-1)
    o = jnp.einsum("bhqk,bhkd->bhqd", w, vs)
    o = jnp.transpose(o, (0, 2, 1, 3))
    return o.reshape(q.shape[0], q.shape[1], -1)


if __name__ == "__main__":
    key = jax.random.PRNGKey(0)
    kq, kk, kv_ = jax.random.split(key, 3)

    # Small shapes consistent with the module.
    batch, seq, hidden, n_heads = 2, 8, 32, 4
    queries = jax.random.normal(kq, (batch, seq, hidden), dtype=jnp.float32)
    keys = jax.random.normal(kk, (batch, seq, hidden), dtype=jnp.float32)
    values = jax.random.normal(kv_, (batch, seq, hidden), dtype=jnp.float32)

    out = multi_head_projection((queries, keys, values), n_heads)
    out = jax.block_until_ready(out)
    expected = _reference(queries, keys, values, n_heads)
    assert out.shape == (batch, seq, hidden)
    # approx=True reciprocal -> slightly looser tolerance than bit-exact.
    assert jnp.allclose(out, expected, atol=2e-3, rtol=2e-3), \
        float(jnp.max(jnp.abs(out - expected)))

    # Second check exercising the multi-tile flash path (2 Lq tiles x 2 KV tiles).
    b2, s2, h2 = 2, 256, 128
    kq2, kk2, kv2 = jax.random.split(jax.random.PRNGKey(1), 3)
    q2 = jax.random.normal(kq2, (b2, s2, h2), dtype=jnp.float32)
    k2 = jax.random.normal(kk2, (b2, s2, h2), dtype=jnp.float32)
    v2 = jax.random.normal(kv2, (b2, s2, h2), dtype=jnp.float32)
    out2 = jax.block_until_ready(
        multi_head_projection((q2, k2, v2), n_heads, q_tile=128, kv_tile=128))
    exp2 = _reference(q2, k2, v2, n_heads)
    assert jnp.allclose(out2, exp2, atol=2e-3, rtol=2e-3), \
        float(jnp.max(jnp.abs(out2 - exp2)))

    print("KERNEL_OK")
</pallas_src>

<mosaic_0001>
module attributes {stable_mosaic.version = 11 : i64} {
  func.func @kernel(%arg0: i32, %arg1: i32, %arg2: i32, %arg3: memref<1x8x32xf32, #tpu.memory_space<vmem>>, %arg4: memref<1x8x32xf32, #tpu.memory_space<vmem>>, %arg5: memref<1x8x32xf32, #tpu.memory_space<vmem>>, %arg6: memref<1x8x32xf32, #tpu.memory_space<vmem>>, %arg7: memref<4x8x1xf32, #tpu.memory_space<vmem>>, %arg8: memref<4x8x1xf32, #tpu.memory_space<vmem>>, %arg9: memref<4x8x8xf32, #tpu.memory_space<vmem>>) attributes {dimension_semantics = [#tpu.dimension_semantics<parallel>, #tpu.dimension_semantics<parallel>, #tpu.dimension_semantics<arbitrary>], iteration_bounds = array<i64: 2, 1, 1>, scalar_prefetch = 0 : i64, scratch_operands = 3 : i64, tpu.core_type = #tpu.core_type<tc>, window_params = [{transform_indices = @transform_0, window_bounds = array<i64: 1, 8, 32>}, {transform_indices = @transform_1, window_bounds = array<i64: 1, 8, 32>}, {transform_indices = @transform_2, window_bounds = array<i64: 1, 8, 32>}, {transform_indices = @transform_3, window_bounds = array<i64: 1, 8, 32>}]} {
    %c0_i32 = arith.constant 0 : i32
    %0 = arith.cmpi eq, %arg2, %c0_i32 : i32
    %1 = arith.extui %0 : i1 to i32
    %c0_i32_0 = arith.constant 0 : i32
    %2 = arith.cmpi ne, %1, %c0_i32_0 : i32
    scf.if %2 {
      %cst_96 = arith.constant 0xFF800000 : f32
      %154 = vector.broadcast %cst_96 : f32 to vector<4x8x1xf32>
      %c0_97 = arith.constant 0 : index
      %c0_98 = arith.constant 0 : index
      %c0_99 = arith.constant 0 : index
      %155 = vector.load %arg7[%c0_97, %c0_98, %c0_99] : memref<4x8x1xf32, #tpu.memory_space<vmem>>, vector<4x8x1xf32>
      tpu.vector_store %arg7[%c0_97, %c0_98, %c0_99], %154 {strides = array<i32>} : memref<4x8x1xf32, #tpu.memory_space<vmem>>, vector<4x8x1xf32>,
      %cst_100 = arith.constant 0.000000e+00 : f32
      %156 = vector.broadcast %cst_100 : f32 to vector<4x8x1xf32>
      %c0_101 = arith.constant 0 : index
      %c0_102 = arith.constant 0 : index
      %c0_103 = arith.constant 0 : index
      %157 = vector.load %arg8[%c0_101, %c0_102, %c0_103] : memref<4x8x1xf32, #tpu.memory_space<vmem>>, vector<4x8x1xf32>
      tpu.vector_store %arg8[%c0_101, %c0_102, %c0_103], %156 {strides = array<i32>} : memref<4x8x1xf32, #tpu.memory_space<vmem>>, vector<4x8x1xf32>,
      %cst_104 = arith.constant 0.000000e+00 : f32
      %158 = vector.broadcast %cst_104 : f32 to vector<4x8x8xf32>
      %c0_105 = arith.constant 0 : index
      %c0_106 = arith.constant 0 : index
      %c0_107 = arith.constant 0 : index
      %159 = vector.load %arg9[%c0_105, %c0_106, %c0_107] : memref<4x8x8xf32, #tpu.memory_space<vmem>>, vector<4x8x8xf32>
      tpu.vector_store %arg9[%c0_105, %c0_106, %c0_107], %158 {strides = array<i32>} : memref<4x8x8xf32, #tpu.memory_space<vmem>>, vector<4x8x8xf32>,
    } else {
    }
    %c0 = arith.constant 0 : index
    %c0_1 = arith.constant 0 : index
    %c0_2 = arith.constant 0 : index
    %3 = vector.load %arg3[%c0, %c0_1, %c0_2] : memref<1x8x32xf32, #tpu.memory_space<vmem>>, vector<1x8x32xf32>
    %4 = vector.shape_cast %3 : vector<1x8x32xf32> to vector<8x32xf32>
    %cst = arith.constant 0.353553385 : f32
    %5 = vector.broadcast %cst : f32 to vector<8x32xf32>
    %6 = arith.mulf %4, %5 : vector<8x32xf32>
    %c0_3 = arith.constant 0 : index
    %c0_4 = arith.constant 0 : index
    %c0_5 = arith.constant 0 : index
    %7 = vector.load %arg4[%c0_3, %c0_4, %c0_5] : memref<1x8x32xf32, #tpu.memory_space<vmem>>, vector<1x8x32xf32>
    %8 = vector.shape_cast %7 : vector<1x8x32xf32> to vector<8x32xf32>
    %c0_6 = arith.constant 0 : index
    %c0_7 = arith.constant 0 : index
    %c0_8 = arith.constant 0 : index
    %9 = vector.load %arg5[%c0_6, %c0_7, %c0_8] : memref<1x8x32xf32, #tpu.memory_space<vmem>>, vector<1x8x32xf32>
    %10 = vector.shape_cast %9 : vector<1x8x32xf32> to vector<8x32xf32>
    %11 = vector.extract_strided_slice %6 {offsets = [0, 0], sizes = [8, 8], strides = [1, 1]} : vector<8x32xf32> to vector<8x8xf32>
    %12 = vector.extract_strided_slice %8 {offsets = [0, 0], sizes = [8, 8], strides = [1, 1]} : vector<8x32xf32> to vector<8x8xf32>
    %13 = vector.extract_strided_slice %10 {offsets = [0, 0], sizes = [8, 8], strides = [1, 1]} : vector<8x32xf32> to vector<8x8xf32>
    %cst_9 = arith.constant dense<0.000000e+00> : vector<8x8xf32>
    %14 = tpu.matmul %11, %12, %cst_9 {dimension_numbers = #tpu.dot_dimension_numbers<[1], [1], [0], [0], [0, 0, 1, 0], [], []>} : vector<8x8xf32>, vector<8x8xf32>, vector<8x8xf32> -> vector<8x8xf32>
    %c0_10 = arith.constant 0 : index
    %c0_11 = arith.constant 0 : index
    %c0_12 = arith.constant 0 : index
    %15 = vector.load %arg7[%c0_10, %c0_11, %c0_12] : memref<4x8x1xf32, #tpu.memory_space<vmem>>, vector<1x8x1xf32>
    %16 = vector.shape_cast %15 : vector<1x8x1xf32> to vector<8x1xf32>
    %cst_13 = arith.constant dense<0xFF800000> : vector<8xf32>
    %17 = vector.multi_reduction <maximumf>, %14, %cst_13 [1] : vector<8x8xf32> to vector<8xf32>
    %18 = vector.shape_cast %17 : vector<8xf32> to vector<8x1xf32>
    %19 = arith.maximumf %16, %18 : vector<8x1xf32>
    %20 = arith.subf %16, %19 : vector<8x1xf32>
    %21 = math.exp %20 : vector<8x1xf32>
    %22 = vector.broadcast %19 : vector<8x1xf32> to vector<8x8xf32>
    %23 = arith.subf %14, %22 : vector<8x8xf32>
    %24 = math.exp %23 : vector<8x8xf32>
    %c0_14 = arith.constant 0 : index
    %c0_15 = arith.constant 0 : index
    %c0_16 = arith.constant 0 : index
    %25 = vector.load %arg8[%c0_14, %c0_15, %c0_16] : memref<4x8x1xf32, #tpu.memory_space<vmem>>, vector<1x8x1xf32>
    %26 = vector.shape_cast %25 : vector<1x8x1xf32> to vector<8x1xf32>
    %27 = arith.mulf %21, %26 : vector<8x1xf32>
    %cst_17 = arith.constant dense<0.000000e+00> : vector<8xf32>
    %28 = vector.multi_reduction <add>, %24, %cst_17 [1] : vector<8x8xf32> to vector<8xf32>
    %29 = vector.shape_cast %28 : vector<8xf32> to vector<8x1xf32>
    %30 = arith.addf %27, %29 : vector<8x1xf32>
    %c0_18 = arith.constant 0 : index
    %c0_19 = arith.constant 0 : index
    %c0_20 = arith.constant 0 : index
    %31 = vector.load %arg8[%c0_18, %c0_19, %c0_20] : memref<4x8x1xf32, #tpu.memory_space<vmem>>, vector<1x8x1xf32>
    %32 = vector.shape_cast %31 : vector<1x8x1xf32> to vector<8x1xf32>
    %33 = vector.shape_cast %30 : vector<8x1xf32> to vector<1x8x1xf32>
    tpu.vector_store %arg8[%c0_18, %c0_19, %c0_20], %33 {strides = array<i32>} : memref<4x8x1xf32, #tpu.memory_space<vmem>>, vector<1x8x1xf32>,
    %c0_21 = arith.constant 0 : index
    %c0_22 = arith.constant 0 : index
    %c0_23 = arith.constant 0 : index
    %34 = vector.load %arg9[%c0_21, %c0_22, %c0_23] : memref<4x8x8xf32, #tpu.memory_space<vmem>>, vector<1x8x8xf32>
    %35 = vector.shape_cast %34 : vector<1x8x8xf32> to vector<8x8xf32>
    %36 = vector.broadcast %21 : vector<8x1xf32> to vector<8x8xf32>
    %37 = arith.mulf %36, %35 : vector<8x8xf32>
    %cst_24 = arith.constant dense<0.000000e+00> : vector<8x8xf32>
    %38 = tpu.matmul %24, %13, %cst_24 {dimension_numbers = #tpu.dot_dimension_numbers<[1], [0], [0], [1], [0, 0, 1, 1], [], []>} : vector<8x8xf32>, vector<8x8xf32>, vector<8x8xf32> -> vector<8x8xf32>
    %39 = arith.addf %37, %38 : vector<8x8xf32>
    %c0_25 = arith.constant 0 : index
    %c0_26 = arith.constant 0 : index
    %c0_27 = arith.constant 0 : index
    %40 = vector.load %arg9[%c0_25, %c0_26, %c0_27] : memref<4x8x8xf32, #tpu.memory_space<vmem>>, vector<1x8x8xf32>
    %41 = vector.shape_cast %40 : vector<1x8x8xf32> to vector<8x8xf32>
    %42 = vector.shape_cast %39 : vector<8x8xf32> to vector<1x8x8xf32>
    tpu.vector_store %arg9[%c0_25, %c0_26, %c0_27], %42 {strides = array<i32>} : memref<4x8x8xf32, #tpu.memory_space<vmem>>, vector<1x8x8xf32>,
    %c0_28 = arith.constant 0 : index
    %c0_29 = arith.constant 0 : index
    %c0_30 = arith.constant 0 : index
    %43 = vector.load %arg7[%c0_28, %c0_29, %c0_30] : memref<4x8x1xf32, #tpu.memory_space<vmem>>, vector<1x8x1xf32>
    %44 = vector.shape_cast %43 : vector<1x8x1xf32> to vector<8x1xf32>
    %45 = vector.shape_cast %19 : vector<8x1xf32> to vector<1x8x1xf32>
    tpu.vector_store %arg7[%c0_28, %c0_29, %c0_30], %45 {strides = array<i32>} : memref<4x8x1xf32, #tpu.memory_space<vmem>>, vector<1x8x1xf32>,
    %46 = vector.extract_strided_slice %6 {offsets = [0, 8], sizes = [8, 8], strides = [1, 1]} : vector<8x32xf32> to vector<8x8xf32>
    %47 = vector.extract_strided_slice %8 {offsets = [0, 8], sizes = [8, 8], strides = [1, 1]} : vector<8x32xf32> to vector<8x8xf32>
    %48 = vector.extract_strided_slice %10 {offsets = [0, 8], sizes = [8, 8], strides = [1, 1]} : vector<8x32xf32> to vector<8x8xf32>
    %cst_31 = arith.constant dense<0.000000e+00> : vector<8x8xf32>
    %49 = tpu.matmul %46, %47, %cst_31 {dimension_numbers = #tpu.dot_dimension_numbers<[1], [1], [0], [0], [0, 0, 1, 0], [], []>} : vector<8x8xf32>, vector<8x8xf32>, vector<8x8xf32> -> vector<8x8xf32>
    %c1 = arith.constant 1 : index
    %c0_32 = arith.constant 0 : index
    %c0_33 = arith.constant 0 : index
    %50 = vector.load %arg7[%c1, %c0_32, %c0_33] : memref<4x8x1xf32, #tpu.memory_space<vmem>>, vector<1x8x1xf32>
    %51 = vector.shape_cast %50 : vector<1x8x1xf32> to vector<8x1xf32>
    %cst_34 = arith.constant dense<0xFF800000> : vector<8xf32>
    %52 = vector.multi_reduction <maximumf>, %49, %cst_34 [1] : vector<8x8xf32> to vector<8xf32>
    %53 = vector.shape_cast %52 : vector<8xf32> to vector<8x1xf32>
    %54 = arith.maximumf %51, %53 : vector<8x1xf32>
    %55 = arith.subf %51, %54 : vector<8x1xf32>
    %56 = math.exp %55 : vector<8x1xf32>
    %57 = vector.broadcast %54 : vector<8x1xf32> to vector<8x8xf32>
    %58 = arith.subf %49, %57 : vector<8x8xf32>
    %59 = math.exp %58 : vector<8x8xf32>
    %c1_35 = arith.constant 1 : index
    %c0_36 = arith.constant 0 : index
    %c0_37 = arith.constant 0 : index
    %60 = vector.load %arg8[%c1_35, %c0_36, %c0_37] : memref<4x8x1xf32, #tpu.memory_space<vmem>>, vector<1x8x1xf32>
    %61 = vector.shape_cast %60 : vector<1x8x1xf32> to vector<8x1xf32>
    %62 = arith.mulf %56, %61 : vector<8x1xf32>
    %cst_38 = arith.constant dense<0.000000e+00> : vector<8xf32>
    %63 = vector.multi_reduction <add>, %59, %cst_38 [1] : vector<8x8xf32> to vector<8xf32>
    %64 = vector.shape_cast %63 : vector<8xf32> to vector<8x1xf32>
    %65 = arith.addf %62, %64 : vector<8x1xf32>
    %c1_39 = arith.constant 1 : index
    %c0_40 = arith.constant 0 : index
    %c0_41 = arith.constant 0 : index
    %66 = vector.load %arg8[%c1_39, %c0_40, %c0_41] : memref<4x8x1xf32, #tpu.memory_space<vmem>>, vector<1x8x1xf32>
    %67 = vector.shape_cast %66 : vector<1x8x1xf32> to vector<8x1xf32>
    %68 = vector.shape_cast %65 : vector<8x1xf32> to vector<1x8x1xf32>
    tpu.vector_store %arg8[%c1_39, %c0_40, %c0_41], %68 {strides = array<i32>} : memref<4x8x1xf32, #tpu.memory_space<vmem>>, vector<1x8x1xf32>,
    %c1_42 = arith.constant 1 : index
    %c0_43 = arith.constant 0 : index
    %c0_44 = arith.constant 0 : index
    %69 = vector.load %arg9[%c1_42, %c0_43, %c0_44] : memref<4x8x8xf32, #tpu.memory_space<vmem>>, vector<1x8x8xf32>
    %70 = vector.shape_cast %69 : vector<1x8x8xf32> to vector<8x8xf32>
    %71 = vector.broadcast %56 : vector<8x1xf32> to vector<8x8xf32>
    %72 = arith.mulf %71, %70 : vector<8x8xf32>
    %cst_45 = arith.constant dense<0.000000e+00> : vector<8x8xf32>
    %73 = tpu.matmul %59, %48, %cst_45 {dimension_numbers = #tpu.dot_dimension_numbers<[1], [0], [0], [1], [0, 0, 1, 1], [], []>} : vector<8x8xf32>, vector<8x8xf32>, vector<8x8xf32> -> vector<8x8xf32>
    %74 = arith.addf %72, %73 : vector<8x8xf32>
    %c1_46 = arith.constant 1 : index
    %c0_47 = arith.constant 0 : index
    %c0_48 = arith.constant 0 : index
    %75 = vector.load %arg9[%c1_46, %c0_47, %c0_48] : memref<4x8x8xf32, #tpu.memory_space<vmem>>, vector<1x8x8xf32>
    %76 = vector.shape_cast %75 : vector<1x8x8xf32> to vector<8x8xf32>
    %77 = vector.shape_cast %74 : vector<8x8xf32> to vector<1x8x8xf32>
    tpu.vector_store %arg9[%c1_46, %c0_47, %c0_48], %77 {strides = array<i32>} : memref<4x8x8xf32, #tpu.memory_space<vmem>>, vector<1x8x8xf32>,
    %c1_49 = arith.constant 1 : index
    %c0_50 = arith.constant 0 : index
    %c0_51 = arith.constant 0 : index
    %78 = vector.load %arg7[%c1_49, %c0_50, %c0_51] : memref<4x8x1xf32, #tpu.memory_space<vmem>>, vector<1x8x1xf32>
    %79 = vector.shape_cast %78 : vector<1x8x1xf32> to vector<8x1xf32>
    %80 = vector.shape_cast %54 : vector<8x1xf32> to vector<1x8x1xf32>
    tpu.vector_store %arg7[%c1_49, %c0_50, %c0_51], %80 {strides = array<i32>} : memref<4x8x1xf32, #tpu.memory_space<vmem>>, vector<1x8x1xf32>,
    %81 = vector.extract_strided_slice %6 {offsets = [0, 16], sizes = [8, 8], strides = [1, 1]} : vector<8x32xf32> to vector<8x8xf32>
    %82 = vector.extract_strided_slice %8 {offsets = [0, 16], sizes = [8, 8], strides = [1, 1]} : vector<8x32xf32> to vector<8x8xf32>
    %83 = vector.extract_strided_slice %10 {offsets = [0, 16], sizes = [8, 8], strides = [1, 1]} : vector<8x32xf32> to vector<8x8xf32>
    %cst_52 = arith.constant dense<0.000000e+00> : vector<8x8xf32>
    %84 = tpu.matmul %81, %82, %cst_52 {dimension_numbers = #tpu.dot_dimension_numbers<[1], [1], [0], [0], [0, 0, 1, 0], [], []>} : vector<8x8xf32>, vector<8x8xf32>, vector<8x8xf32> -> vector<8x8xf32>
    %c2 = arith.constant 2 : index
    %c0_53 = arith.constant 0 : index
    %c0_54 = arith.constant 0 : index
    %85 = vector.load %arg7[%c2, %c0_53, %c0_54] : memref<4x8x1xf32, #tpu.memory_space<vmem>>, vector<1x8x1xf32>
    %86 = vector.shape_cast %85 : vector<1x8x1xf32> to vector<8x1xf32>
    %cst_55 = arith.constant dense<0xFF800000> : vector<8xf32>
    %87 = vector.multi_reduction <maximumf>, %84, %cst_55 [1] : vector<8x8xf32> to vector<8xf32>
    %88 = vector.shape_cast %87 : vector<8xf32> to vector<8x1xf32>
    %89 = arith.maximumf %86, %88 : vector<8x1xf32>
    %90 = arith.subf %86, %89 : vector<8x1xf32>
    %91 = math.exp %90 : vector<8x1xf32>
    %92 = vector.broadcast %89 : vector<8x1xf32> to vector<8x8xf32>
    %93 = arith.subf %84, %92 : vector<8x8xf32>
    %94 = math.exp %93 : vector<8x8xf32>
    %c2_56 = arith.constant 2 : index
    %c0_57 = arith.constant 0 : index
    %c0_58 = arith.constant 0 : index
    %95 = vector.load %arg8[%c2_56, %c0_57, %c0_58] : memref<4x8x1xf32, #tpu.memory_space<vmem>>, vector<1x8x1xf32>
    %96 = vector.shape_cast %95 : vector<1x8x1xf32> to vector<8x1xf32>
    %97 = arith.mulf %91, %96 : vector<8x1xf32>
    %cst_59 = arith.constant dense<0.000000e+00> : vector<8xf32>
    %98 = vector.multi_reduction <add>, %94, %cst_59 [1] : vector<8x8xf32> to vector<8xf32>
    %99 = vector.shape_cast %98 : vector<8xf32> to vector<8x1xf32>
    %100 = arith.addf %97, %99 : vector<8x1xf32>
    %c2_60 = arith.constant 2 : index
    %c0_61 = arith.constant 0 : index
    %c0_62 = arith.constant 0 : index
    %101 = vector.load %arg8[%c2_60, %c0_61, %c0_62] : memref<4x8x1xf32, #tpu.memory_space<vmem>>, vector<1x8x1xf32>
    %102 = vector.shape_cast %101 : vector<1x8x1xf32> to vector<8x1xf32>
    %103 = vector.shape_cast %100 : vector<8x1xf32> to vector<1x8x1xf32>
    tpu.vector_store %arg8[%c2_60, %c0_61, %c0_62], %103 {strides = array<i32>} : memref<4x8x1xf32, #tpu.memory_space<vmem>>, vector<1x8x1xf32>,
    %c2_63 = arith.constant 2 : index
    %c0_64 = arith.constant 0 : index
    %c0_65 = arith.constant 0 : index
    %104 = vector.load %arg9[%c2_63, %c0_64, %c0_65] : memref<4x8x8xf32, #tpu.memory_space<vmem>>, vector<1x8x8xf32>
    %105 = vector.shape_cast %104 : vector<1x8x8xf32> to vector<8x8xf32>
    %106 = vector.broadcast %91 : vector<8x1xf32> to vector<8x8xf32>
    %107 = arith.mulf %106, %105 : vector<8x8xf32>
    %cst_66 = arith.constant dense<0.000000e+00> : vector<8x8xf32>
    %108 = tpu.matmul %94, %83, %cst_66 {dimension_numbers = #tpu.dot_dimension_numbers<[1], [0], [0], [1], [0, 0, 1, 1], [], []>} : vector<8x8xf32>, vector<8x8xf32>, vector<8x8xf32> -> vector<8x8xf32>
    %109 = arith.addf %107, %108 : vector<8x8xf32>
    %c2_67 = arith.constant 2 : index
    %c0_68 = arith.constant 0 : index
    %c0_69 = arith.constant 0 : index
    %110 = vector.load %arg9[%c2_67, %c0_68, %c0_69] : memref<4x8x8xf32, #tpu.memory_space<vmem>>, vector<1x8x8xf32>
    %111 = vector.shape_cast %110 : vector<1x8x8xf32> to vector<8x8xf32>
    %112 = vector.shape_cast %109 : vector<8x8xf32> to vector<1x8x8xf32>
    tpu.vector_store %arg9[%c2_67, %c0_68, %c0_69], %112 {strides = array<i32>} : memref<4x8x8xf32, #tpu.memory_space<vmem>>, vector<1x8x8xf32>,
    %c2_70 = arith.constant 2 : index
    %c0_71 = arith.constant 0 : index
    %c0_72 = arith.constant 0 : index
    %113 = vector.load %arg7[%c2_70, %c0_71, %c0_72] : memref<4x8x1xf32, #tpu.memory_space<vmem>>, vector<1x8x1xf32>
    %114 = vector.shape_cast %113 : vector<1x8x1xf32> to vector<8x1xf32>
    %115 = vector.shape_cast %89 : vector<8x1xf32> to vector<1x8x1xf32>
    tpu.vector_store %arg7[%c2_70, %c0_71, %c0_72], %115 {strides = array<i32>} : memref<4x8x1xf32, #tpu.memory_space<vmem>>, vector<1x8x1xf32>,
    %116 = vector.extract_strided_slice %6 {offsets = [0, 24], sizes = [8, 8], strides = [1, 1]} : vector<8x32xf32> to vector<8x8xf32>
    %117 = vector.extract_strided_slice %8 {offsets = [0, 24], sizes = [8, 8], strides = [1, 1]} : vector<8x32xf32> to vector<8x8xf32>
    %118 = vector.extract_strided_slice %10 {offsets = [0, 24], sizes = [8, 8], strides = [1, 1]} : vector<8x32xf32> to vector<8x8xf32>
    %cst_73 = arith.constant dense<0.000000e+00> : vector<8x8xf32>
    %119 = tpu.matmul %116, %117, %cst_73 {dimension_numbers = #tpu.dot_dimension_numbers<[1], [1], [0], [0], [0, 0, 1, 0], [], []>} : vector<8x8xf32>, vector<8x8xf32>, vector<8x8xf32> -> vector<8x8xf32>
    %c3 = arith.constant 3 : index
    %c0_74 = arith.constant 0 : index
    %c0_75 = arith.constant 0 : index
    %120 = vector.load %arg7[%c3, %c0_74, %c0_75] : memref<4x8x1xf32, #tpu.memory_space<vmem>>, vector<1x8x1xf32>
    %121 = vector.shape_cast %120 : vector<1x8x1xf32> to vector<8x1xf32>
    %cst_76 = arith.constant dense<0xFF800000> : vector<8xf32>
    %122 = vector.multi_reduction <maximumf>, %119, %cst_76 [1] : vector<8x8xf32> to vector<8xf32>
    %123 = vector.shape_cast %122 : vector<8xf32> to vector<8x1xf32>
    %124 = arith.maximumf %121, %123 : vector<8x1xf32>
    %125 = arith.subf %121, %124 : vector<8x1xf32>
    %126 = math.exp %125 : vector<8x1xf32>
    %127 = vector.broadcast %124 : vector<8x1xf32> to vector<8x8xf32>
    %128 = arith.subf %119, %127 : vector<8x8xf32>
    %129 = math.exp %128 : vector<8x8xf32>
    %c3_77 = arith.constant 3 : index
    %c0_78 = arith.constant 0 : index
    %c0_79 = arith.constant 0 : index
    %130 = vector.load %arg8[%c3_77, %c0_78, %c0_79] : memref<4x8x1xf32, #tpu.memory_space<vmem>>, vector<1x8x1xf32>
    %131 = vector.shape_cast %130 : vector<1x8x1xf32> to vector<8x1xf32>
    %132 = arith.mulf %126, %131 : vector<8x1xf32>
    %cst_80 = arith.constant dense<0.000000e+00> : vector<8xf32>
    %133 = vector.multi_reduction <add>, %129, %cst_80 [1] : vector<8x8xf32> to vector<8xf32>
    %134 = vector.shape_cast %133 : vector<8xf32> to vector<8x1xf32>
    %135 = arith.addf %132, %134 : vector<8x1xf32>
    %c3_81 = arith.constant 3 : index
    %c0_82 = arith.constant 0 : index
    %c0_83 = arith.constant 0 : index
    %136 = vector.load %arg8[%c3_81, %c0_82, %c0_83] : memref<4x8x1xf32, #tpu.memory_space<vmem>>, vector<1x8x1xf32>
    %137 = vector.shape_cast %136 : vector<1x8x1xf32> to vector<8x1xf32>
    %138 = vector.shape_cast %135 : vector<8x1xf32> to vector<1x8x1xf32>
    tpu.vector_store %arg8[%c3_81, %c0_82, %c0_83], %138 {strides = array<i32>} : memref<4x8x1xf32, #tpu.memory_space<vmem>>, vector<1x8x1xf32>,
    %c3_84 = arith.constant 3 : index
    %c0_85 = arith.constant 0 : index
    %c0_86 = arith.constant 0 : index
    %139 = vector.load %arg9[%c3_84, %c0_85, %c0_86] : memref<4x8x8xf32, #tpu.memory_space<vmem>>, vector<1x8x8xf32>
    %140 = vector.shape_cast %139 : vector<1x8x8xf32> to vector<8x8xf32>
    %141 = vector.broadcast %126 : vector<8x1xf32> to vector<8x8xf32>
    %142 = arith.mulf %141, %140 : vector<8x8xf32>
    %cst_87 = arith.constant dense<0.000000e+00> : vector<8x8xf32>
    %143 = tpu.matmul %129, %118, %cst_87 {dimension_numbers = #tpu.dot_dimension_numbers<[1], [0], [0], [1], [0, 0, 1, 1], [], []>} : vector<8x8xf32>, vector<8x8xf32>, vector<8x8xf32> -> vector<8x8xf32>
    %144 = arith.addf %142, %143 : vector<8x8xf32>
    %c3_88 = arith.constant 3 : index
    %c0_89 = arith.constant 0 : index
    %c0_90 = arith.constant 0 : index
    %145 = vector.load %arg9[%c3_88, %c0_89, %c0_90] : memref<4x8x8xf32, #tpu.memory_space<vmem>>, vector<1x8x8xf32>
    %146 = vector.shape_cast %145 : vector<1x8x8xf32> to vector<8x8xf32>
    %147 = vector.shape_cast %144 : vector<8x8xf32> to vector<1x8x8xf32>
    tpu.vector_store %arg9[%c3_88, %c0_89, %c0_90], %147 {strides = array<i32>} : memref<4x8x8xf32, #tpu.memory_space<vmem>>, vector<1x8x8xf32>,
    %c3_91 = arith.constant 3 : index
    %c0_92 = arith.constant 0 : index
    %c0_93 = arith.constant 0 : index
    %148 = vector.load %arg7[%c3_91, %c0_92, %c0_93] : memref<4x8x1xf32, #tpu.memory_space<vmem>>, vector<1x8x1xf32>
    %149 = vector.shape_cast %148 : vector<1x8x1xf32> to vector<8x1xf32>
    %150 = vector.shape_cast %124 : vector<8x1xf32> to vector<1x8x1xf32>
    tpu.vector_store %arg7[%c3_91, %c0_92, %c0_93], %150 {strides = array<i32>} : memref<4x8x1xf32, #tpu.memory_space<vmem>>, vector<1x8x1xf32>,
    %c0_i32_94 = arith.constant 0 : i32
    %151 = arith.cmpi eq, %arg2, %c0_i32_94 : i32
    %152 = arith.extui %151 : i1 to i32
    %c0_i32_95 = arith.constant 0 : i32
    %153 = arith.cmpi ne, %152, %c0_i32_95 : i32
    scf.if %153 {
      %c0_96 = arith.constant 0 : index
      %c0_97 = arith.constant 0 : index
      %c0_98 = arith.constant 0 : index
      %154 = vector.load %arg8[%c0_96, %c0_97, %c0_98] : memref<4x8x1xf32, #tpu.memory_space<vmem>>, vector<1x8x1xf32>
      %155 = vector.shape_cast %154 : vector<1x8x1xf32> to vector<8x1xf32>
      %156 = tpu.reciprocal %155 {approx = true} : vector<8x1xf32> -> vector<8x1xf32>
      %c0_99 = arith.constant 0 : index
      %c0_100 = arith.constant 0 : index
      %c0_101 = arith.constant 0 : index
      %157 = vector.load %arg9[%c0_99, %c0_100, %c0_101] : memref<4x8x8xf32, #tpu.memory_space<vmem>>, vector<1x8x8xf32>
      %158 = vector.shape_cast %157 : vector<1x8x8xf32> to vector<8x8xf32>
      %159 = vector.broadcast %156 : vector<8x1xf32> to vector<8x8xf32>
      %160 = arith.mulf %158, %159 : vector<8x8xf32>
      %c0_102 = arith.constant 0 : index
      %c0_103 = arith.constant 0 : index
      %c0_104 = arith.constant 0 : index
      %161 = vector.load %arg6[%c0_102, %c0_103, %c0_104] : memref<1x8x32xf32, #tpu.memory_space<vmem>>, vector<1x8x8xf32>
      %162 = vector.shape_cast %161 : vector<1x8x8xf32> to vector<8x8xf32>
      %163 = vector.shape_cast %160 : vector<8x8xf32> to vector<1x8x8xf32>
      tpu.vector_store %arg6[%c0_102, %c0_103, %c0_104], %163 {strides = array<i32>} : memref<1x8x32xf32, #tpu.memory_space<vmem>>, vector<1x8x8xf32>,
      %c1_105 = arith.constant 1 : index
      %c0_106 = arith.constant 0 : index
      %c0_107 = arith.constant 0 : index
      %164 = vector.load %arg8[%c1_105, %c0_106, %c0_107] : memref<4x8x1xf32, #tpu.memory_space<vmem>>, vector<1x8x1xf32>
      %165 = vector.shape_cast %164 : vector<1x8x1xf32> to vector<8x1xf32>
      %166 = tpu.reciprocal %165 {approx = true} : vector<8x1xf32> -> vector<8x1xf32>
      %c1_108 = arith.constant 1 : index
      %c0_109 = arith.constant 0 : index
      %c0_110 = arith.constant 0 : index
      %167 = vector.load %arg9[%c1_108, %c0_109, %c0_110] : memref<4x8x8xf32, #tpu.memory_space<vmem>>, vector<1x8x8xf32>
      %168 = vector.shape_cast %167 : vector<1x8x8xf32> to vector<8x8xf32>
      %169 = vector.broadcast %166 : vector<8x1xf32> to vector<8x8xf32>
      %170 = arith.mulf %168, %169 : vector<8x8xf32>
      %c0_111 = arith.constant 0 : index
      %c0_112 = arith.constant 0 : index
      %c8 = arith.constant 8 : index
      %171 = vector.load %arg6[%c0_111, %c0_112, %c8] : memref<1x8x32xf32, #tpu.memory_space<vmem>>, vector<1x8x8xf32>
      %172 = vector.shape_cast %171 : vector<1x8x8xf32> to vector<8x8xf32>
      %173 = vector.shape_cast %170 : vector<8x8xf32> to vector<1x8x8xf32>
      tpu.vector_store %arg6[%c0_111, %c0_112, %c8], %173 {strides = array<i32>} : memref<1x8x32xf32, #tpu.memory_space<vmem>>, vector<1x8x8xf32>,
      %c2_113 = arith.constant 2 : index
      %c0_114 = arith.constant 0 : index
      %c0_115 = arith.constant 0 : index
      %174 = vector.load %arg8[%c2_113, %c0_114, %c0_115] : memref<4x8x1xf32, #tpu.memory_space<vmem>>, vector<1x8x1xf32>
      %175 = vector.shape_cast %174 : vector<1x8x1xf32> to vector<8x1xf32>
      %176 = tpu.reciprocal %175 {approx = true} : vector<8x1xf32> -> vector<8x1xf32>
      %c2_116 = arith.constant 2 : index
      %c0_117 = arith.constant 0 : index
      %c0_118 = arith.constant 0 : index
      %177 = vector.load %arg9[%c2_116, %c0_117, %c0_118] : memref<4x8x8xf32, #tpu.memory_space<vmem>>, vector<1x8x8xf32>
      %178 = vector.shape_cast %177 : vector<1x8x8xf32> to vector<8x8xf32>
      %179 = vector.broadcast %176 : vector<8x1xf32> to vector<8x8xf32>
      %180 = arith.mulf %178, %179 : vector<8x8xf32>
      %c0_119 = arith.constant 0 : index
      %c0_120 = arith.constant 0 : index
      %c16 = arith.constant 16 : index
      %181 = vector.load %arg6[%c0_119, %c0_120, %c16] : memref<1x8x32xf32, #tpu.memory_space<vmem>>, vector<1x8x8xf32>
      %182 = vector.shape_cast %181 : vector<1x8x8xf32> to vector<8x8xf32>
      %183 = vector.shape_cast %180 : vector<8x8xf32> to vector<1x8x8xf32>
      tpu.vector_store %arg6[%c0_119, %c0_120, %c16], %183 {strides = array<i32>} : memref<1x8x32xf32, #tpu.memory_space<vmem>>, vector<1x8x8xf32>,
      %c3_121 = arith.constant 3 : index
      %c0_122 = arith.constant 0 : index
      %c0_123 = arith.constant 0 : index
      %184 = vector.load %arg8[%c3_121, %c0_122, %c0_123] : memref<4x8x1xf32, #tpu.memory_space<vmem>>, vector<1x8x1xf32>
      %185 = vector.shape_cast %184 : vector<1x8x1xf32> to vector<8x1xf32>
      %186 = tpu.reciprocal %185 {approx = true} : vector<8x1xf32> -> vector<8x1xf32>
      %c3_124 = arith.constant 3 : index
      %c0_125 = arith.constant 0 : index
      %c0_126 = arith.constant 0 : index
      %187 = vector.load %arg9[%c3_124, %c0_125, %c0_126] : memref<4x8x8xf32, #tpu.memory_space<vmem>>, vector<1x8x8xf32>
      %188 = vector.shape_cast %187 : vector<1x8x8xf32> to vector<8x8xf32>
      %189 = vector.broadcast %186 : vector<8x1xf32> to vector<8x8xf32>
      %190 = arith.mulf %188, %189 : vector<8x8xf32>
      %c0_127 = arith.constant 0 : index
      %c0_128 = arith.constant 0 : index
      %c24 = arith.constant 24 : index
      %191 = vector.load %arg6[%c0_127, %c0_128, %c24] : memref<1x8x32xf32, #tpu.memory_space<vmem>>, vector<1x8x8xf32>
      %192 = vector.shape_cast %191 : vector<1x8x8xf32> to vector<8x8xf32>
      %193 = vector.shape_cast %190 : vector<8x8xf32> to vector<1x8x8xf32>
      tpu.vector_store %arg6[%c0_127, %c0_128, %c24], %193 {strides = array<i32>} : memref<1x8x32xf32, #tpu.memory_space<vmem>>, vector<1x8x8xf32>,
    } else {
    }
    return
  }
  func.func @transform_0(%arg0: i32, %arg1: i32, %arg2: i32) -> (i32, i32, i32) {
    %c0_i32 = arith.constant 0 : i32
    %c0_i32_0 = arith.constant 0 : i32
    return %arg0, %arg1, %c0_i32 : i32, i32, i32
  }
  func.func @transform_1(%arg0: i32, %arg1: i32, %arg2: i32) -> (i32, i32, i32) {
    %c0_i32 = arith.constant 0 : i32
    %c0_i32_0 = arith.constant 0 : i32
    return %arg0, %arg2, %c0_i32 : i32, i32, i32
  }
  func.func @transform_2(%arg0: i32, %arg1: i32, %arg2: i32) -> (i32, i32, i32) {
    %c0_i32 = arith.constant 0 : i32
    %c0_i32_0 = arith.constant 0 : i32
    return %arg0, %arg2, %c0_i32 : i32, i32, i32
  }
  func.func @transform_3(%arg0: i32, %arg1: i32, %arg2: i32) -> (i32, i32, i32) {
    %c0_i32 = arith.constant 0 : i32
    %c0_i32_0 = arith.constant 0 : i32
    return %arg0, %arg1, %c0_i32 : i32, i32, i32
  }
}

</mosaic_0001>

<llo_original>
// kernel: tpu_custom_call.1
$region0: #{tpu_custom_call.1}
  #allocation0 [shape = 'u32[]', space=smem, size = 0x4, offset = 0x4, fixed_abs, tag = 'smem constant byte address 0x4 - core index']
  #allocation1 [shape = 'u32[144,128]{1,0:T(1,128)}', space=vmem, size = 0x12000, scoped, tag = 'internal scratch']
  #allocation2 [shape = 'f32[4,8,1]{2,1,0:T(8,128)}', space=vmem, size = 0x4000, scoped, tag = 'scratch operand']
  #allocation3 [shape = 'f32[4,8,1]{2,1,0:T(8,128)}', space=vmem, size = 0x4000, scoped, tag = 'scratch operand']
  #allocation4 [shape = 'f32[4,8,8]{2,1,0:T(8,128)}', space=vmem, size = 0x4000, scoped, tag = 'scratch operand']
  %s0 = inlined_call_operand.hbm [shape: f32[2,8,32], index: 0, kind: input, shape index: {}]
  %s1 = inlined_call_operand.hbm [shape: f32[2,8,32], index: 1, kind: input, shape index: {}]
  %s2 = inlined_call_operand.hbm [shape: f32[2,8,32], index: 2, kind: input, shape index: {}]
  %s3 = inlined_call_operand.hbm [shape: f32[2,8,32], index: 3, kind: output, shape index: {}]
  %s4 = sld [smem:[#allocation0]]
  $region65: #{tpu_custom_call.1} parent=0
    _
  %s6 = ssub.s32 1, %s4
  %s7 = scalar_select 0, %s6, %s4
  $region1: #{tpu_custom_call.1} parent=0
    #allocation5 [shape = 'u8[8192]{0}', space=vmem, size = 0x2000, scoped, tag = 'input window, operand 0']
    #allocation6 [shape = 's32[2]{0}', space=sflag, size = 0x8, scoped, tag = 'scoped memory for tpu_custom_call.1']
    #allocation7 [shape = 's32[2]{0}', space=sflag, size = 0x8, scoped, tag = 'scoped memory for tpu_custom_call.1']
    #allocation8 [shape = 'u8[8192]{0}', space=vmem, size = 0x2000, scoped, tag = 'input window, operand 1']
    #allocation9 [shape = 's32[2]{0}', space=sflag, size = 0x8, scoped, tag = 'scoped memory for tpu_custom_call.1']
    #allocation10 [shape = 'u8[8192]{0}', space=vmem, size = 0x2000, scoped, tag = 'input window, operand 2']
    #allocation11 [shape = 'u8[8192]{0}', space=vmem, size = 0x2000, scoped, tag = 'output window, operand 0']
    %8 = vsyncpa [#allocation6], 0
    %s9 = scalar_lea.sflag [#allocation6], 1
    %10 = vsyncpa %s9, 0
    %11 = vsyncpa [#allocation9], 0
    %s12 = scalar_lea.sflag [#allocation9], 1
    %13 = vsyncpa %s12, 0
    %14 = vsyncpa [#allocation7], 0
    %s15 = scalar_lea.sflag [#allocation7], 1
    %16 = vsyncpa %s15, 0
    loop: start=0, step=1, limit=4
    $region2: #{tpu_custom_call.1} parent=1 // loop_pre_header
      _
    $region3: #{tpu_custom_call.1} parent=1 // loop_header
      %s18 = sphi 0, %s22
      %p19 = scmp.ge.s32.totalorder %s18, 4
      %s25 = sphi 0, %s44
      %s26 = sphi 0, %s40
      %s27 = sphi 0, %s36
      %s28 = sphi 0, %s25
      %s29 = sphi 0, %s26
      %s30 = sphi 0, %s27
      %s31 = sphi 0, %s28
      %s32 = sphi 0, %s29
      %s33 = sphi 0, %s30
      %s49 = sphi 0, %s51
      %s52 = sphi 0, %s49
      %s53 = sphi 0, %s52
      %s69 = sphi 0, %s53
      %s77 = sphi 0, %s79
      %s80 = sphi 0, %s77
      %s81 = sphi 0, %s80
      %s97 = sphi 0, %s81
      %s105 = sphi 0, %s107
      %s108 = sphi 0, %s105
      %s109 = sphi 0, %s108
      %s125 = sphi 0, %s109
      %s133 = sphi 0, %s135
      %s136 = sphi 0, %s133
      %s137 = sphi 0, %s136
      %s153 = sphi 0, %s137
    $region4: #{tpu_custom_call.1} parent=1 // loop_header_branch
      %21 = sbr.rel (%p19) target = $region8
    $region5: #{tpu_custom_call.1} parent=1 // loop_body
      %s23 = ssub.s32 %s18, 1
      %s24 = ssub.s32 %s18, 2
      %s34 = sadd.s32 1, %s27
      %p35 = scmp.ge.s32.totalorder %s34, 1
      %s36 = scalar_select %p35, 0, %s34
      %s37 = sadd.s32 1, %s26
      %s38 = scalar_select %p35, %s37, %s26
      %p39 = scmp.ge.s32.totalorder %s38, 1
      %s40 = scalar_select %p39, 0, %s38
      %s41 = sadd.s32 1, %s25
      %s42 = scalar_select %p39, %s41, %s25
      %p43 = scmp.ge.s32.totalorder %s42, 2
      %s44 = scalar_select %p43, 0, %s42
      %s45 = ssub.s32 %s25, %s44
      %s46 = ssub.s32 %s26, %s40
      %s47 = sor.u32 %s45, %s46
      %p48 = scmp.eq.s32.totalorder %s47, 0
      %s50 = sadd.s32 %s49, 1
      %s51 = scalar_select %p48, %s49, %s50
      %p54 = pneg %p48
      %p55 = scmp.eq.s32.totalorder %s18, 1
      %p56 = por %p54, %p55
      %p57 = scmp.ne.s32.totalorder %s49, %s52
      %p58 = scmp.eq.s32.totalorder %s18, 0
      %p59 = por %p57, %p58
      %p60 = scmp.ne.s32.totalorder %s49, %s52
      %p61 = scmp.eq.s32.totalorder %s23, 1
      %p62 = por %p60, %p61
      %p63 = scmp.ne.s32.totalorder %s52, %s53
      %p64 = scmp.eq.s32.totalorder %s23, 0
      %p65 = por %p63, %p64
      %p66 = scmp.ne.s32.totalorder %s52, %s53
      %p67 = scmp.eq.s32.totalorder %s24, 1
      %p68 = por %p66, %p67
      %p70 = scmp.ne.s32.totalorder %s53, %s69
      %p71 = scmp.eq.s32.totalorder %s24, 0
      %p72 = por %p70, %p71
      %s73 = ssub.s32 %s25, %s44
      %s74 = ssub.s32 %s27, %s36
      %s75 = sor.u32 %s73, %s74
      %p76 = scmp.eq.s32.totalorder %s75, 0
      %s78 = sadd.s32 %s77, 1
      %s79 = scalar_select %p76, %s77, %s78
      %p82 = pneg %p76
      %p83 = scmp.eq.s32.totalorder %s18, 1
      %p84 = por %p82, %p83
      %p85 = scmp.ne.s32.totalorder %s77, %s80
      %p86 = scmp.eq.s32.totalorder %s18, 0
      %p87 = por %p85, %p86
      %p88 = scmp.ne.s32.totalorder %s77, %s80
      %p89 = scmp.eq.s32.totalorder %s23, 1
      %p90 = por %p88, %p89
      %p91 = scmp.ne.s32.totalorder %s80, %s81
      %p92 = scmp.eq.s32.totalorder %s23, 0
      %p93 = por %p91, %p92
      %p94 = scmp.ne.s32.totalorder %s80, %s81
      %p95 = scmp.eq.s32.totalorder %s24, 1
      %p96 = por %p94, %p95
      %p98 = scmp.ne.s32.totalorder %s81, %s97
      %p99 = scmp.eq.s32.totalorder %s24, 0
      %p100 = por %p98, %p99
      %s101 = ssub.s32 %s25, %s44
      %s102 = ssub.s32 %s27, %s36
      %s103 = sor.u32 %s101, %s102
      %p104 = scmp.eq.s32.totalorder %s103, 0
      %s106 = sadd.s32 %s105, 1
      %s107 = scalar_select %p104, %s105, %s106
      %p110 = pneg %p104
      %p111 = scmp.eq.s32.totalorder %s18, 1
      %p112 = por %p110, %p111
      %p113 = scmp.ne.s32.totalorder %s105, %s108
      %p114 = scmp.eq.s32.totalorder %s18, 0
      %p115 = por %p113, %p114
      %p116 = scmp.ne.s32.totalorder %s105, %s108
      %p117 = scmp.eq.s32.totalorder %s23, 1
      %p118 = por %p116, %p117
      %p119 = scmp.ne.s32.totalorder %s108, %s109
      %p120 = scmp.eq.s32.totalorder %s23, 0
      %p121 = por %p119, %p120
      %p122 = scmp.ne.s32.totalorder %s108, %s109
      %p123 = scmp.eq.s32.totalorder %s24, 1
      %p124 = por %p122, %p123
      %p126 = scmp.ne.s32.totalorder %s109, %s125
      %p127 = scmp.eq.s32.totalorder %s24, 0
      %p128 = por %p126, %p127
      %s129 = ssub.s32 %s25, %s44
      %s130 = ssub.s32 %s26, %s40
      %s131 = sor.u32 %s129, %s130
      %p132 = scmp.eq.s32.totalorder %s131, 0
      %s134 = sadd.s32 %s133, 1
      %s135 = scalar_select %p132, %s133, %s134
      %p138 = pneg %p132
      %p139 = scmp.eq.s32.totalorder %s18, 1
      %p140 = por %p138, %p139
      %p141 = scmp.ne.s32.totalorder %s133, %s136
      %p142 = scmp.eq.s32.totalorder %s18, 0
      %p143 = por %p141, %p142
      %p144 = scmp.ne.s32.totalorder %s133, %s136
      %p145 = scmp.eq.s32.totalorder %s23, 1
      %p146 = por %p144, %p145
      %p147 = scmp.ne.s32.totalorder %s136, %s137
      %p148 = scmp.eq.s32.totalorder %s23, 0
      %p149 = por %p147, %p148
      %p150 = scmp.ne.s32.totalorder %s136, %s137
      %p151 = scmp.eq.s32.totalorder %s24, 1
      %p152 = por %p150, %p151
      %p154 = scmp.ne.s32.totalorder %s137, %s153
      %p155 = scmp.eq.s32.totalorder %s24, 0
      %p156 = por %p154, %p155
      %p157 = scmp.le.s32.totalorder 1, %s18
      %p158 = scmp.lt.s32.totalorder %s18, 3
      %p159 = pnand %p157, %p158
      %p160 = pneg %p159
      // Predicated region
      $region9: #{tpu_custom_call.1} parent=5 // pred_check
        _
      $region10: #{tpu_custom_call.1} parent=5 // pred_check_branch
        %162 = sbr.rel (%p159) target = $region12
      $region11: #{tpu_custom_call.1} parent=5 // pred_region
        %s163 = ssub.s32 %s18, 1
      $region12: #{tpu_custom_call.1} parent=5 // pred_fallthru
        _
      %p164 = scmp.lt.s32.totalorder %s18, 2
      // Predicated region
      $region13: #{tpu_custom_call.1} parent=5 // pred_check
        %p165 = pneg %p164
      $region14: #{tpu_custom_call.1} parent=5 // pred_check_branch
        %167 = sbr.rel (%p165) target = $region16
      $region15: #{tpu_custom_call.1} parent=5 // pred_region
        // Predicated region
        $region17: #{tpu_custom_call.1} parent=15 // pred_check
          %p168 = pneg %p59
        $region18: #{tpu_custom_call.1} parent=15 // pred_check_branch
          %170 = sbr.rel (%p168) target = $region20
        $region19: #{tpu_custom_call.1} parent=15 // pred_region
          %s171 = sand.u32 %s49, 1
          %s172 = scalar_lea.sflag [#allocation6], %s171
          %s173 = sand.u32 %s49, 1
          %s174 = smul.addr %s173, 8
          %s175 = scalar_lea.vmem [#allocation5], %s174
          %s177 = ssub.s32 128, 128
          %178 = vsyncadd %s172, %s177
          %s179 = sadd.s32 %s26, %s25
          %s180 = smul.addr %s179, 128
          %s181 = scalar_lea.hbm %s0, %s180
          %s183 = sshll.u32 %s175, 4
          %s184 = int_to_ptr.vmem [resolvable:$true] %s183
          %186 = dma.hbm_to_vmem [thread:$0]  %s181, 128, %s184, %s172
        $region20: #{tpu_custom_call.1} parent=15 // pred_fallthru
          _
        // Predicated region
        $region21: #{tpu_custom_call.1} parent=15 // pred_check
          %p187 = pneg %p87
        $region22: #{tpu_custom_call.1} parent=15 // pred_check_branch
          %189 = sbr.rel (%p187) target = $region24
        $region23: #{tpu_custom_call.1} parent=15 // pred_region
          %s190 = sand.u32 %s18, 1
          %s191 = scalar_lea.sflag [#allocation9], %s190
          %s192 = sand.u32 %s77, 1
          %s193 = smul.addr %s192, 8
          %s194 = scalar_lea.vmem [#allocation8], %s193
          %s196 = ssub.s32 128, 128
          %197 = vsyncadd %s191, %s196
          %s198 = sadd.s32 %s27, %s25
          %s199 = smul.addr %s198, 128
          %s200 = scalar_lea.hbm %s1, %s199
          %s202 = sshll.u32 %s194, 4
          %s203 = int_to_ptr.vmem [resolvable:$true] %s202
          %205 = dma.hbm_to_vmem [thread:$0]  %s200, 128, %s203, %s191
        $region24: #{tpu_custom_call.1} parent=15 // pred_fallthru
          _
        // Predicated region
        $region25: #{tpu_custom_call.1} parent=15 // pred_check
          %p206 = pneg %p115
        $region26: #{tpu_custom_call.1} parent=15 // pred_check_branch
          %208 = sbr.rel (%p206) target = $region28
        $region27: #{tpu_custom_call.1} parent=15 // pred_region
          %s209 = sand.u32 %s18, 1
          %s210 = scalar_lea.sflag [#allocation9], %s209
          %s211 = sand.u32 %s105, 1
          %s212 = smul.addr %s211, 8
          %s213 = scalar_lea.vmem [#allocation10], %s212
          %s215 = ssub.s32 128, 128
          %216 = vsyncadd %s210, %s215
          %s217 = sadd.s32 %s27, %s25
          %s218 = smul.addr %s217, 128
          %s219 = scalar_lea.hbm %s2, %s218
          %s221 = sshll.u32 %s213, 4
          %s222 = int_to_ptr.vmem [resolvable:$true] %s221
          %224 = dma.hbm_to_vmem [thread:$0]  %s219, 128, %s222, %s210
        $region28: #{tpu_custom_call.1} parent=15 // pred_fallthru
          _
      $region16: #{tpu_custom_call.1} parent=5 // pred_fallthru
        _
      %p225 = scmp.le.s32.totalorder 1, %s18
      %p226 = scmp.lt.s32.totalorder %s18, 3
      %p227 = pnand %p225, %p226
      %p228 = pneg %p227
      // Predicated region
      $region29: #{tpu_custom_call.1} parent=5 // pred_check
        _
      $region30: #{tpu_custom_call.1} parent=5 // pred_check_branch
        %230 = sbr.rel (%p227) target = $region32
      $region31: #{tpu_custom_call.1} parent=5 // pred_region
        %s231 = ssub.s32 %s18, 1
        %s232 = sand.u32 %s52, 1
        %s233 = scalar_lea.sflag [#allocation6], %s232
        %s234 = sand.u32 %s52, 1
        %s235 = smul.addr %s234, 8
        %s236 = scalar_lea.vmem [#allocation5], %s235
        // Predicated region
        $region33: #{tpu_custom_call.1} parent=31 // pred_check
          %p237 = pneg %p65
        $region34: #{tpu_custom_call.1} parent=31 // pred_check_branch
          %239 = sbr.rel (%p237) target = $region36
        $region35: #{tpu_custom_call.1} parent=31 // pred_region
          %240 = dma.done %s233, 128
        $region36: #{tpu_custom_call.1} parent=31 // pred_fallthru
          _
        %s241 = sand.u32 %s23, 1
        %s242 = scalar_lea.sflag [#allocation9], %s241
        %s243 = sand.u32 %s80, 1
        %s244 = smul.addr %s243, 8
        %s245 = scalar_lea.vmem [#allocation8], %s244
        // Predicated region
        $region37: #{tpu_custom_call.1} parent=31 // pred_check
          %p246 = pneg %p93
        $region38: #{tpu_custom_call.1} parent=31 // pred_check_branch
          %248 = sbr.rel (%p246) target = $region40
        $region39: #{tpu_custom_call.1} parent=31 // pred_region
          %249 = dma.done %s242, 128
        $region40: #{tpu_custom_call.1} parent=31 // pred_fallthru
          _
        %s250 = sand.u32 %s23, 1
        %s251 = scalar_lea.sflag [#allocation9], %s250
        %s252 = sand.u32 %s108, 1
        %s253 = smul.addr %s252, 8
        %s254 = scalar_lea.vmem [#allocation10], %s253
        // Predicated region
        $region41: #{tpu_custom_call.1} parent=31 // pred_check
          %p255 = pneg %p121
        $region42: #{tpu_custom_call.1} parent=31 // pred_check_branch
          %257 = sbr.rel (%p255) target = $region44
        $region43: #{tpu_custom_call.1} parent=31 // pred_region
          %258 = dma.done %s251, 128
        $region44: #{tpu_custom_call.1} parent=31 // pred_fallthru
          _
        %s259 = sand.u32 %s52, 1
        %s260 = scalar_lea.sflag [#allocation6], %s259
        %s261 = sand.u32 %s52, 1
        %s262 = smul.addr %s261, 8
        %s263 = scalar_lea.vmem [#allocation5], %s262
        %p264 = pneg %p65
        %p265 = pneg %p62
        %s266 = sand.u32 %s23, 1
        %s267 = scalar_lea.sflag [#allocation9], %s266
        %s268 = sand.u32 %s80, 1
        %s269 = smul.addr %s268, 8
        %s270 = scalar_lea.vmem [#allocation8], %s269
        %p271 = pneg %p93
        %p272 = pneg %p90
        %s273 = sand.u32 %s23, 1
        %s274 = scalar_lea.sflag [#allocation9], %s273
        %s275 = sand.u32 %s108, 1
        %s276 = smul.addr %s275, 8
        %s277 = scalar_lea.vmem [#allocation10], %s276
        %p278 = pneg %p121
        %p279 = pneg %p118
        %p280 = pneg %p149
        %p281 = pneg %p146
        %s282 = sand.u32 %s136, 1
        %s283 = scalar_lea.sflag [#allocation7], %s282
        %s284 = sand.u32 %s136, 1
        %s285 = smul.addr %s284, 8
        %s286 = scalar_lea.vmem [#allocation11], %s285
        %p287 = scmp.eq.s32.totalorder %s30, 0
        // Predicated region
        $region45: #{tpu_custom_call.1} parent=31 // pred_check
          %p288 = pneg %p287
        $region46: #{tpu_custom_call.1} parent=31 // pred_check_branch
          %290 = sbr.rel (%p288) target = $region48
        $region47: #{tpu_custom_call.1} parent=31 // pred_region
          %vm291 = vcmask 7168
          %292 = vst.msk [vmem:[#allocation2] sm:$0xff] %vm291, -inf
          %293 = vst.msk [vmem:[#allocation2 + $0x8] sm:$0xff] %vm291, -inf
          %294 = vst.msk [vmem:[#allocation2 + $0x10] sm:$0xff] %vm291, -inf
          %295 = vst.msk [vmem:[#allocation2 + $0x18] sm:$0xff] %vm291, -inf
          %296 = vst.msk [vmem:[#allocation3] sm:$0xff] %vm291, 0.0
          %297 = vst.msk [vmem:[#allocation3 + $0x8] sm:$0xff] %vm291, 0.0
          %298 = vst.msk [vmem:[#allocation3 + $0x10] sm:$0xff] %vm291, 0.0
          %299 = vst.msk [vmem:[#allocation3 + $0x18] sm:$0xff] %vm291, 0.0
          %vm300 = vcmask 64512
          %301 = vst.msk [vmem:[#allocation4] sm:$0xff] %vm300, 0.0
          %302 = vst.msk [vmem:[#allocation4 + $0x8] sm:$0xff] %vm300, 0.0
          %303 = vst.msk [vmem:[#allocation4 + $0x10] sm:$0xff] %vm300, 0.0
          %304 = vst.msk [vmem:[#allocation4 + $0x18] sm:$0xff] %vm300, 0.0
        $region48: #{tpu_custom_call.1} parent=31 // pred_fallthru
          _
        %v305 = vld [vmem:[%s236] sm:$0xff]
        %v306 = vmul.f32 %v305, 0.35355338
        %v307 = vld [vmem:[%s245] sm:$0xff]
        %v308 = vld [vmem:[%s254] sm:$0xff]
        %vm309 = vcmask 64512
        %v311 = vsel %vm309, %v306, 0
        %v314 = vsel %vm309, %v307, 0
        %316 = vmatprep.subr.mxu0 0.0
        %317 = vmatpush1.xpose.msra.mxu0 0.0
        %318 = vmatprep.subr.mxu0 0.0
        %319 = vmatpush1.xpose.msra.mxu0 0.0
        %320 = vmatprep.subr.mxu0 0.0
        %321 = vmatpush1.xpose.msra.mxu0 0.0
        %322 = vmatprep.subr.mxu0 0.0
        %323 = vmatpush1.xpose.msra.mxu0 0.0
        %324 = vmatprep.subr.mxu0 0.0
        %325 = vmatpush1.xpose.msra.mxu0 0.0
        %326 = vmatprep.subr.mxu0 0.0
        %327 = vmatpush1.xpose.msra.mxu0 0.0
        %328 = vmatprep.subr.mxu0 0.0
        %329 = vmatpush1.xpose.msra.mxu0 0.0
        %330 = vmatprep.subr.mxu0 0.0
        %331 = vmatpush1.xpose.msra.mxu0 0.0
        %332 = vmatprep.subr.mxu0 0.0
        %333 = vmatpush1.xpose.msra.mxu0 0.0
        %334 = vmatprep.subr.mxu0 0.0
        %335 = vmatpush1.xpose.msra.mxu0 0.0
        %336 = vmatprep.subr.mxu0 0.0
        %337 = vmatpush1.xpose.msra.mxu0 0.0
        %338 = vmatprep.subr.mxu0 0.0
        %339 = vmatpush1.xpose.msra.mxu0 0.0
        %340 = vmatprep.subr.mxu0 0.0
        %341 = vmatpush1.xpose.msra.mxu0 0.0
        %342 = vmatprep.subr.mxu0 0.0
        %343 = vmatpush1.xpose.msra.mxu0 0.0
        %344 = vmatprep.subr.mxu0 0.0
        %345 = vmatpush1.xpose.msra.mxu0 0.0
        %346 = vmatprep.subr.mxu0 0.0
        %347 = vmatpush1.xpose.msra.mxu0 %v314
        %348 = vmatprep.subr.mxu0 0.0
        %349 = vmatpush2.xpose.msra.mxu0 0.0
        %350 = vmatprep.subr.mxu0 0.0
        %351 = vmatpush2.xpose.msra.mxu0 0.0
        %352 = vmatprep.subr.mxu0 0.0
        %353 = vmatpush2.xpose.msra.mxu0 0.0
        %354 = vmatprep.subr.mxu0 0.0
        %355 = vmatpush2.xpose.msra.mxu0 0.0
        %356 = vmatprep.subr.mxu0 0.0
        %357 = vmatpush2.xpose.msra.mxu0 0.0
        %358 = vmatprep.subr.mxu0 0.0
        %359 = vmatpush2.xpose.msra.mxu0 0.0
        %360 = vmatprep.subr.mxu0 0.0
        %361 = vmatpush2.xpose.msra.mxu0 0.0
        %362 = vmatprep.subr.mxu0 0.0
        %363 = vmatpush2.xpose.msra.mxu0 0.0
        %364 = vmatprep.subr.mxu0 0.0
        %365 = vmatpush2.xpose.msra.mxu0 0.0
        %366 = vmatprep.subr.mxu0 0.0
        %367 = vmatpush2.xpose.msra.mxu0 0.0
        %368 = vmatprep.subr.mxu0 0.0
        %369 = vmatpush2.xpose.msra.mxu0 0.0
        %370 = vmatprep.subr.mxu0 0.0
        %371 = vmatpush2.xpose.msra.mxu0 0.0
        %372 = vmatprep.subr.mxu0 0.0
        %373 = vmatpush2.xpose.msra.mxu0 0.0
        %374 = vmatprep.subr.mxu0 0.0
        %375 = vmatpush2.xpose.msra.mxu0 0.0
        %376 = vmatprep.subr.mxu0 0.0
        %377 = vmatpush2.xpose.msra.mxu0 0.0
        %378 = vmatprep.subr.mxu0 0.0
        %379 = vmatpush2.xpose.msra.mxu0 0.0
        %380 = vmatprep.mubr.f32.mxu0 0.0
        %381 = vmatmul.mubr.f32.gmra.mxu0 %v311
        %v382 = vpop.f32.mrf.mxu0
        %v383 = vadd.f32 0.0, %v382
        %v384 = vpop.f32.mrf.mxu0
        %385 = vdwg.mxu0
        %v386 = vld [vmem:[#allocation2] sm:$0xff]
        %v387 = vsel %vm309, %v383, -inf
        %388 = vmax.xlane.f32.xlu0 %v387
        %v389 = vpop.xlane.xlu0 %388
        %v390 = vmax.f32 %v386, %v389
        %v391 = vsub.f32 %v386, %v390
        %v392 = vmul.f32 %v391, 1.442695
        %v393 = vpow.pop %v392
        %395 = vset.pattern.permute.xlu0 0
        %396 = vperm.xlu0 %395, %v390
        %v397 = vpop.permute.xlu0 %396
        %v399 = vsub.f32 %v383, %v397
        %v400 = vmul.f32 %v399, 1.442695
        %v401 = vpow.pop %v400
        %v402 = vld [vmem:[#allocation3] sm:$0xff]
        %v403 = vmul.f32 %v393, %v402
        %v404 = vsel %vm309, %v401, 0.0
        %405 = vadd.xlane.f32.xlu0 %v404
        %v406 = vpop.xlane.xlu0 %405
        %v407 = vadd.f32 %v403, %v406
        %vm408 = vcmask 7168
        %409 = vst.msk [vmem:[#allocation3] sm:$0xff] %vm408, %v407
        %v410 = vld [vmem:[#allocation4] sm:$0xff]
        %412 = vset.pattern.permute.xlu0 0
        %413 = vperm.xlu0 %412, %v393
        %v414 = vpop.permute.xlu0 %413
        %v416 = vmul.f32 %v414, %v410
        %v418 = vsel %vm309, %v401, 0
        %420 = vmatprep.subr.mxu0 0.0
        %421 = vmatpush1.msra.mxu0 0.0
        %422 = vmatprep.subr.mxu0 0.0
        %423 = vmatpush1.msra.mxu0 0.0
        %424 = vmatprep.subr.mxu0 0.0
        %425 = vmatpush1.msra.mxu0 0.0
        %426 = vmatprep.subr.mxu0 0.0
        %427 = vmatpush1.msra.mxu0 0.0
        %428 = vmatprep.subr.mxu0 0.0
        %429 = vmatpush1.msra.mxu0 0.0
        %430 = vmatprep.subr.mxu0 0.0
        %431 = vmatpush1.msra.mxu0 0.0
        %432 = vmatprep.subr.mxu0 0.0
        %433 = vmatpush1.msra.mxu0 0.0
        %434 = vmatprep.subr.mxu0 0.0
        %435 = vmatpush1.msra.mxu0 0.0
        %436 = vmatprep.subr.mxu0 0.0
        %437 = vmatpush1.msra.mxu0 0.0
        %438 = vmatprep.subr.mxu0 0.0
        %439 = vmatpush1.msra.mxu0 0.0
        %440 = vmatprep.subr.mxu0 0.0
        %441 = vmatpush1.msra.mxu0 0.0
        %442 = vmatprep.subr.mxu0 0.0
        %443 = vmatpush1.msra.mxu0 0.0
        %444 = vmatprep.subr.mxu0 0.0
        %445 = vmatpush1.msra.mxu0 0.0
        %446 = vmatprep.subr.mxu0 0.0
        %447 = vmatpush1.msra.mxu0 0.0
        %448 = vmatprep.subr.mxu0 0.0
        %449 = vmatpush1.msra.mxu0 0.0
        %450 = vmatprep.subr.mxu0 0.0
        %451 = vmatpush1.msra.mxu0 %v308
        %452 = vmatprep.subr.mxu0 0.0
        %453 = vmatpush2.msra.mxu0 0.0
        %454 = vmatprep.subr.mxu0 0.0
        %455 = vmatpush2.msra.mxu0 0.0
        %456 = vmatprep.subr.mxu0 0.0
        %457 = vmatpush2.msra.mxu0 0.0
        %458 = vmatprep.subr.mxu0 0.0
        %459 = vmatpush2.msra.mxu0 0.0
        %460 = vmatprep.subr.mxu0 0.0
        %461 = vmatpush2.msra.mxu0 0.0
        %462 = vmatprep.subr.mxu0 0.0
        %463 = vmatpush2.msra.mxu0 0.0
        %464 = vmatprep.subr.mxu0 0.0
        %465 = vmatpush2.msra.mxu0 0.0
        %466 = vmatprep.subr.mxu0 0.0
        %467 = vmatpush2.msra.mxu0 0.0
        %468 = vmatprep.subr.mxu0 0.0
        %469 = vmatpush2.msra.mxu0 0.0
        %470 = vmatprep.subr.mxu0 0.0
        %471 = vmatpush2.msra.mxu0 0.0
        %472 = vmatprep.subr.mxu0 0.0
        %473 = vmatpush2.msra.mxu0 0.0
        %474 = vmatprep.subr.mxu0 0.0
        %475 = vmatpush2.msra.mxu0 0.0
        %476 = vmatprep.subr.mxu0 0.0
        %477 = vmatpush2.msra.mxu0 0.0
        %478 = vmatprep.subr.mxu0 0.0
        %479 = vmatpush2.msra.mxu0 0.0
        %480 = vmatprep.subr.mxu0 0.0
        %481 = vmatpush2.msra.mxu0 0.0
        %482 = vmatprep.subr.mxu0 0.0
        %483 = vmatpush2.msra.mxu0 0.0
        %484 = vmatprep.mubr.f32.mxu0 0.0
        %485 = vmatmul.mubr.f32.gmra.mxu0 %v418
        %v486 = vpop.f32.mrf.mxu0
        %v487 = vadd.f32 0.0, %v486
        %v488 = vpop.f32.mrf.mxu0
        %489 = vdwg.mxu0
        %v490 = vadd.f32 %v416, %v487
        %491 = vst.msk [vmem:[#allocation4] sm:$0xff] %vm309, %v490
        %492 = vst.msk [vmem:[#allocation2] sm:$0xff] %vm408, %v390
        %493 = vrot.lane.b32.xlu0 %v306, 120
        %v494 = vpop.permute.xlu0 %493
        %495 = vrot.lane.b32.xlu0 %v307, 120
        %v496 = vpop.permute.xlu0 %495
        %v497 = vsel %vm309, %v494, 0
        %v499 = vsel %vm309, %v496, 0
        %501 = vmatprep.subr.mxu0 0.0
        %502 = vmatpush1.xpose.msra.mxu0 0.0
        %503 = vmatprep.subr.mxu0 0.0
        %504 = vmatpush1.xpose.msra.mxu0 0.0
        %505 = vmatprep.subr.mxu0 0.0
        %506 = vmatpush1.xpose.msra.mxu0 0.0
        %507 = vmatprep.subr.mxu0 0.0
        %508 = vmatpush1.xpose.msra.mxu0 0.0
        %509 = vmatprep.subr.mxu0 0.0
        %510 = vmatpush1.xpose.msra.mxu0 0.0
        %511 = vmatprep.subr.mxu0 0.0
        %512 = vmatpush1.xpose.msra.mxu0 0.0
        %513 = vmatprep.subr.mxu0 0.0
        %514 = vmatpush1.xpose.msra.mxu0 0.0
        %515 = vmatprep.subr.mxu0 0.0
        %516 = vmatpush1.xpose.msra.mxu0 0.0
        %517 = vmatprep.subr.mxu0 0.0
        %518 = vmatpush1.xpose.msra.mxu0 0.0
        %519 = vmatprep.subr.mxu0 0.0
        %520 = vmatpush1.xpose.msra.mxu0 0.0
        %521 = vmatprep.subr.mxu0 0.0
        %522 = vmatpush1.xpose.msra.mxu0 0.0
        %523 = vmatprep.subr.mxu0 0.0
        %524 = vmatpush1.xpose.msra.mxu0 0.0
        %525 = vmatprep.subr.mxu0 0.0
        %526 = vmatpush1.xpose.msra.mxu0 0.0
        %527 = vmatprep.subr.mxu0 0.0
        %528 = vmatpush1.xpose.msra.mxu0 0.0
        %529 = vmatprep.subr.mxu0 0.0
        %530 = vmatpush1.xpose.msra.mxu0 0.0
        %531 = vmatprep.subr.mxu0 0.0
        %532 = vmatpush1.xpose.msra.mxu0 %v499
        %533 = vmatprep.subr.mxu0 0.0
        %534 = vmatpush2.xpose.msra.mxu0 0.0
        %535 = vmatprep.subr.mxu0 0.0
        %536 = vmatpush2.xpose.msra.mxu0 0.0
        %537 = vmatprep.subr.mxu0 0.0
        %538 = vmatpush2.xpose.msra.mxu0 0.0
        %539 = vmatprep.subr.mxu0 0.0
        %540 = vmatpush2.xpose.msra.mxu0 0.0
        %541 = vmatprep.subr.mxu0 0.0
        %542 = vmatpush2.xpose.msra.mxu0 0.0
        %543 = vmatprep.subr.mxu0 0.0
        %544 = vmatpush2.xpose.msra.mxu0 0.0
        %545 = vmatprep.subr.mxu0 0.0
        %546 = vmatpush2.xpose.msra.mxu0 0.0
        %547 = vmatprep.subr.mxu0 0.0
        %548 = vmatpush2.xpose.msra.mxu0 0.0
        %549 = vmatprep.subr.mxu0 0.0
        %550 = vmatpush2.xpose.msra.mxu0 0.0
        %551 = vmatprep.subr.mxu0 0.0
        %552 = vmatpush2.xpose.msra.mxu0 0.0
        %553 = vmatprep.subr.mxu0 0.0
        %554 = vmatpush2.xpose.msra.mxu0 0.0
        %555 = vmatprep.subr.mxu0 0.0
        %556 = vmatpush2.xpose.msra.mxu0 0.0
        %557 = vmatprep.subr.mxu0 0.0
        %558 = vmatpush2.xpose.msra.mxu0 0.0
        %559 = vmatprep.subr.mxu0 0.0
        %560 = vmatpush2.xpose.msra.mxu0 0.0
        %561 = vmatprep.subr.mxu0 0.0
        %562 = vmatpush2.xpose.msra.mxu0 0.0
        %563 = vmatprep.subr.mxu0 0.0
        %564 = vmatpush2.xpose.msra.mxu0 0.0
        %565 = vmatprep.mubr.f32.mxu0 0.0
        %566 = vmatmul.mubr.f32.gmra.mxu0 %v497
        %v567 = vpop.f32.mrf.mxu0
        %v568 = vadd.f32 0.0, %v567
        %v569 = vpop.f32.mrf.mxu0
        %570 = vdwg.mxu0
        %s571 = scalar_lea.vmem [#allocation2], 8
        %v572 = vld [vmem:[%s571] sm:$0xff]
        %v573 = vsel %vm309, %v568, -inf
        %574 = vmax.xlane.f32.xlu0 %v573
        %v575 = vpop.xlane.xlu0 %574
        %v576 = vmax.f32 %v572, %v575
        %v577 = vsub.f32 %v572, %v576
        %v578 = vmul.f32 %v577, 1.442695
        %v579 = vpow.pop %v578
        %581 = vset.pattern.permute.xlu0 0
        %582 = vperm.xlu0 %581, %v576
        %v583 = vpop.permute.xlu0 %582
        %v585 = vsub.f32 %v568, %v583
        %v586 = vmul.f32 %v585, 1.442695
        %v587 = vpow.pop %v586
        %s588 = scalar_lea.vmem [#allocation3], 8
        %v589 = vld [vmem:[%s588] sm:$0xff]
        %v590 = vmul.f32 %v579, %v589
        %v591 = vsel %vm309, %v587, 0.0
        %592 = vadd.xlane.f32.xlu0 %v591
        %v593 = vpop.xlane.xlu0 %592
        %v594 = vadd.f32 %v590, %v593
        %595 = vst.msk [vmem:[%s588] sm:$0xff] %vm408, %v594
        %s596 = scalar_lea.vmem [#allocation4], 8
        %v597 = vld [vmem:[%s596] sm:$0xff]
        %599 = vset.pattern.permute.xlu0 0
        %600 = vperm.xlu0 %599, %v579
        %v601 = vpop.permute.xlu0 %600
        %v603 = vmul.f32 %v601, %v597
        %605 = vrot.lane.b32.xlu0 %v308, 120
        %v606 = vpop.permute.xlu0 %605
        %v609 = vsel %vm309, %v587, 0
        %611 = vmatprep.subr.mxu0 0.0
        %612 = vmatpush1.msra.mxu0 0.0
        %613 = vmatprep.subr.mxu0 0.0
        %614 = vmatpush1.msra.mxu0 0.0
        %615 = vmatprep.subr.mxu0 0.0
        %616 = vmatpush1.msra.mxu0 0.0
        %617 = vmatprep.subr.mxu0 0.0
        %618 = vmatpush1.msra.mxu0 0.0
        %619 = vmatprep.subr.mxu0 0.0
        %620 = vmatpush1.msra.mxu0 0.0
        %621 = vmatprep.subr.mxu0 0.0
        %622 = vmatpush1.msra.mxu0 0.0
        %623 = vmatprep.subr.mxu0 0.0
        %624 = vmatpush1.msra.mxu0 0.0
        %625 = vmatprep.subr.mxu0 0.0
        %626 = vmatpush1.msra.mxu0 0.0
        %627 = vmatprep.subr.mxu0 0.0
        %628 = vmatpush1.msra.mxu0 0.0
        %629 = vmatprep.subr.mxu0 0.0
        %630 = vmatpush1.msra.mxu0 0.0
        %631 = vmatprep.subr.mxu0 0.0
        %632 = vmatpush1.msra.mxu0 0.0
        %633 = vmatprep.subr.mxu0 0.0
        %634 = vmatpush1.msra.mxu0 0.0
        %635 = vmatprep.subr.mxu0 0.0
        %636 = vmatpush1.msra.mxu0 0.0
        %637 = vmatprep.subr.mxu0 0.0
        %638 = vmatpush1.msra.mxu0 0.0
        %639 = vmatprep.subr.mxu0 0.0
        %640 = vmatpush1.msra.mxu0 0.0
        %641 = vmatprep.subr.mxu0 0.0
        %642 = vmatpush1.msra.mxu0 %v606
        %643 = vmatprep.subr.mxu0 0.0
        %644 = vmatpush2.msra.mxu0 0.0
        %645 = vmatprep.subr.mxu0 0.0
        %646 = vmatpush2.msra.mxu0 0.0
        %647 = vmatprep.subr.mxu0 0.0
        %648 = vmatpush2.msra.mxu0 0.0
        %649 = vmatprep.subr.mxu0 0.0
        %650 = vmatpush2.msra.mxu0 0.0
        %651 = vmatprep.subr.mxu0 0.0
        %652 = vmatpush2.msra.mxu0 0.0
        %653 = vmatprep.subr.mxu0 0.0
        %654 = vmatpush2.msra.mxu0 0.0
        %655 = vmatprep.subr.mxu0 0.0
        %656 = vmatpush2.msra.mxu0 0.0
        %657 = vmatprep.subr.mxu0 0.0
        %658 = vmatpush2.msra.mxu0 0.0
        %659 = vmatprep.subr.mxu0 0.0
        %660 = vmatpush2.msra.mxu0 0.0
        %661 = vmatprep.subr.mxu0 0.0
        %662 = vmatpush2.msra.mxu0 0.0
        %663 = vmatprep.subr.mxu0 0.0
        %664 = vmatpush2.msra.mxu0 0.0
        %665 = vmatprep.subr.mxu0 0.0
        %666 = vmatpush2.msra.mxu0 0.0
        %667 = vmatprep.subr.mxu0 0.0
        %668 = vmatpush2.msra.mxu0 0.0
        %669 = vmatprep.subr.mxu0 0.0
        %670 = vmatpush2.msra.mxu0 0.0
        %671 = vmatprep.subr.mxu0 0.0
        %672 = vmatpush2.msra.mxu0 0.0
        %673 = vmatprep.subr.mxu0 0.0
        %674 = vmatpush2.msra.mxu0 0.0
        %675 = vmatprep.mubr.f32.mxu0 0.0
        %676 = vmatmul.mubr.f32.gmra.mxu0 %v609
        %v677 = vpop.f32.mrf.mxu0
        %v678 = vadd.f32 0.0, %v677
        %v679 = vpop.f32.mrf.mxu0
        %680 = vdwg.mxu0
        %v681 = vadd.f32 %v603, %v678
        %682 = vst.msk [vmem:[%s596] sm:$0xff] %vm309, %v681
        %683 = vst.msk [vmem:[%s571] sm:$0xff] %vm408, %v576
        %684 = vrot.lane.b32.xlu0 %v306, 112
        %v685 = vpop.permute.xlu0 %684
        %686 = vrot.lane.b32.xlu0 %v307, 112
        %v687 = vpop.permute.xlu0 %686
        %v688 = vsel %vm309, %v685, 0
        %v690 = vsel %vm309, %v687, 0
        %692 = vmatprep.subr.mxu0 0.0
        %693 = vmatpush1.xpose.msra.mxu0 0.0
        %694 = vmatprep.subr.mxu0 0.0
        %695 = vmatpush1.xpose.msra.mxu0 0.0
        %696 = vmatprep.subr.mxu0 0.0
        %697 = vmatpush1.xpose.msra.mxu0 0.0
        %698 = vmatprep.subr.mxu0 0.0
        %699 = vmatpush1.xpose.msra.mxu0 0.0
        %700 = vmatprep.subr.mxu0 0.0
        %701 = vmatpush1.xpose.msra.mxu0 0.0
        %702 = vmatprep.subr.mxu0 0.0
        %703 = vmatpush1.xpose.msra.mxu0 0.0
        %704 = vmatprep.subr.mxu0 0.0
        %705 = vmatpush1.xpose.msra.mxu0 0.0
        %706 = vmatprep.subr.mxu0 0.0
        %707 = vmatpush1.xpose.msra.mxu0 0.0
        %708 = vmatprep.subr.mxu0 0.0
        %709 = vmatpush1.xpose.msra.mxu0 0.0
        %710 = vmatprep.subr.mxu0 0.0
        %711 = vmatpush1.xpose.msra.mxu0 0.0
        %712 = vmatprep.subr.mxu0 0.0
        %713 = vmatpush1.xpose.msra.mxu0 0.0
        %714 = vmatprep.subr.mxu0 0.0
        %715 = vmatpush1.xpose.msra.mxu0 0.0
        %716 = vmatprep.subr.mxu0 0.0
        %717 = vmatpush1.xpose.msra.mxu0 0.0
        %718 = vmatprep.subr.mxu0 0.0
        %719 = vmatpush1.xpose.msra.mxu0 0.0
        %720 = vmatprep.subr.mxu0 0.0
        %721 = vmatpush1.xpose.msra.mxu0 0.0
        %722 = vmatprep.subr.mxu0 0.0
        %723 = vmatpush1.xpose.msra.mxu0 %v690
        %724 = vmatprep.subr.mxu0 0.0
        %725 = vmatpush2.xpose.msra.mxu0 0.0
        %726 = vmatprep.subr.mxu0 0.0
        %727 = vmatpush2.xpose.msra.mxu0 0.0
        %728 = vmatprep.subr.mxu0 0.0
        %729 = vmatpush2.xpose.msra.mxu0 0.0
        %730 = vmatprep.subr.mxu0 0.0
        %731 = vmatpush2.xpose.msra.mxu0 0.0
        %732 = vmatprep.subr.mxu0 0.0
        %733 = vmatpush2.xpose.msra.mxu0 0.0
        %734 = vmatprep.subr.mxu0 0.0
        %735 = vmatpush2.xpose.msra.mxu0 0.0
        %736 = vmatprep.subr.mxu0 0.0
        %737 = vmatpush2.xpose.msra.mxu0 0.0
        %738 = vmatprep.subr.mxu0 0.0
        %739 = vmatpush2.xpose.msra.mxu0 0.0
        %740 = vmatprep.subr.mxu0 0.0
        %741 = vmatpush2.xpose.msra.mxu0 0.0
        %742 = vmatprep.subr.mxu0 0.0
        %743 = vmatpush2.xpose.msra.mxu0 0.0
        %744 = vmatprep.subr.mxu0 0.0
        %745 = vmatpush2.xpose.msra.mxu0 0.0
        %746 = vmatprep.subr.mxu0 0.0
        %747 = vmatpush2.xpose.msra.mxu0 0.0
        %748 = vmatprep.subr.mxu0 0.0
        %749 = vmatpush2.xpose.msra.mxu0 0.0
        %750 = vmatprep.subr.mxu0 0.0
        %751 = vmatpush2.xpose.msra.mxu0 0.0
        %752 = vmatprep.subr.mxu0 0.0
        %753 = vmatpush2.xpose.msra.mxu0 0.0
        %754 = vmatprep.subr.mxu0 0.0
        %755 = vmatpush2.xpose.msra.mxu0 0.0
        %756 = vmatprep.mubr.f32.mxu0 0.0
        %757 = vmatmul.mubr.f32.gmra.mxu0 %v688
        %v758 = vpop.f32.mrf.mxu0
        %v759 = vadd.f32 0.0, %v758
        %v760 = vpop.f32.mrf.mxu0
        %761 = vdwg.mxu0
        %s762 = scalar_lea.vmem [#allocation2], 16
        %v763 = vld [vmem:[%s762] sm:$0xff]
        %v764 = vsel %vm309, %v759, -inf
        %765 = vmax.xlane.f32.xlu0 %v764
        %v766 = vpop.xlane.xlu0 %765
        %v767 = vmax.f32 %v763, %v766
        %v768 = vsub.f32 %v763, %v767
        %v769 = vmul.f32 %v768, 1.442695
        %v770 = vpow.pop %v769
        %772 = vset.pattern.permute.xlu0 0
        %773 = vperm.xlu0 %772, %v767
        %v774 = vpop.permute.xlu0 %773
        %v776 = vsub.f32 %v759, %v774
        %v777 = vmul.f32 %v776, 1.442695
        %v778 = vpow.pop %v777
        %s779 = scalar_lea.vmem [#allocation3], 16
        %v780 = vld [vmem:[%s779] sm:$0xff]
        %v781 = vmul.f32 %v770, %v780
        %v782 = vsel %vm309, %v778, 0.0
        %783 = vadd.xlane.f32.xlu0 %v782
        %v784 = vpop.xlane.xlu0 %783
        %v785 = vadd.f32 %v781, %v784
        %786 = vst.msk [vmem:[%s779] sm:$0xff] %vm408, %v785
        %s787 = scalar_lea.vmem [#allocation4], 16
        %v788 = vld [vmem:[%s787] sm:$0xff]
        %790 = vset.pattern.permute.xlu0 0
        %791 = vperm.xlu0 %790, %v770
        %v792 = vpop.permute.xlu0 %791
        %v794 = vmul.f32 %v792, %v788
        %795 = vrot.lane.b32.xlu0 %v308, 112
        %v796 = vpop.permute.xlu0 %795
        %v799 = vsel %vm309, %v778, 0
        %801 = vmatprep.subr.mxu0 0.0
        %802 = vmatpush1.msra.mxu0 0.0
        %803 = vmatprep.subr.mxu0 0.0
        %804 = vmatpush1.msra.mxu0 0.0
        %805 = vmatprep.subr.mxu0 0.0
        %806 = vmatpush1.msra.mxu0 0.0
        %807 = vmatprep.subr.mxu0 0.0
        %808 = vmatpush1.msra.mxu0 0.0
        %809 = vmatprep.subr.mxu0 0.0
        %810 = vmatpush1.msra.mxu0 0.0
        %811 = vmatprep.subr.mxu0 0.0
        %812 = vmatpush1.msra.mxu0 0.0
        %813 = vmatprep.subr.mxu0 0.0
        %814 = vmatpush1.msra.mxu0 0.0
        %815 = vmatprep.subr.mxu0 0.0
        %816 = vmatpush1.msra.mxu0 0.0
        %817 = vmatprep.subr.mxu0 0.0
        %818 = vmatpush1.msra.mxu0 0.0
        %819 = vmatprep.subr.mxu0 0.0
        %820 = vmatpush1.msra.mxu0 0.0
        %821 = vmatprep.subr.mxu0 0.0
        %822 = vmatpush1.msra.mxu0 0.0
        %823 = vmatprep.subr.mxu0 0.0
        %824 = vmatpush1.msra.mxu0 0.0
        %825 = vmatprep.subr.mxu0 0.0
        %826 = vmatpush1.msra.mxu0 0.0
        %827 = vmatprep.subr.mxu0 0.0
        %828 = vmatpush1.msra.mxu0 0.0
        %829 = vmatprep.subr.mxu0 0.0
        %830 = vmatpush1.msra.mxu0 0.0
        %831 = vmatprep.subr.mxu0 0.0
        %832 = vmatpush1.msra.mxu0 %v796
        %833 = vmatprep.subr.mxu0 0.0
        %834 = vmatpush2.msra.mxu0 0.0
        %835 = vmatprep.subr.mxu0 0.0
        %836 = vmatpush2.msra.mxu0 0.0
        %837 = vmatprep.subr.mxu0 0.0
        %838 = vmatpush2.msra.mxu0 0.0
        %839 = vmatprep.subr.mxu0 0.0
        %840 = vmatpush2.msra.mxu0 0.0
        %841 = vmatprep.subr.mxu0 0.0
        %842 = vmatpush2.msra.mxu0 0.0
        %843 = vmatprep.subr.mxu0 0.0
        %844 = vmatpush2.msra.mxu0 0.0
        %845 = vmatprep.subr.mxu0 0.0
        %846 = vmatpush2.msra.mxu0 0.0
        %847 = vmatprep.subr.mxu0 0.0
        %848 = vmatpush2.msra.mxu0 0.0
        %849 = vmatprep.subr.mxu0 0.0
        %850 = vmatpush2.msra.mxu0 0.0
        %851 = vmatprep.subr.mxu0 0.0
        %852 = vmatpush2.msra.mxu0 0.0
        %853 = vmatprep.subr.mxu0 0.0
        %854 = vmatpush2.msra.mxu0 0.0
        %855 = vmatprep.subr.mxu0 0.0
        %856 = vmatpush2.msra.mxu0 0.0
        %857 = vmatprep.subr.mxu0 0.0
        %858 = vmatpush2.msra.mxu0 0.0
        %859 = vmatprep.subr.mxu0 0.0
        %860 = vmatpush2.msra.mxu0 0.0
        %861 = vmatprep.subr.mxu0 0.0
        %862 = vmatpush2.msra.mxu0 0.0
        %863 = vmatprep.subr.mxu0 0.0
        %864 = vmatpush2.msra.mxu0 0.0
        %865 = vmatprep.mubr.f32.mxu0 0.0
        %866 = vmatmul.mubr.f32.gmra.mxu0 %v799
        %v867 = vpop.f32.mrf.mxu0
        %v868 = vadd.f32 0.0, %v867
        %v869 = vpop.f32.mrf.mxu0
        %870 = vdwg.mxu0
        %v871 = vadd.f32 %v794, %v868
        %872 = vst.msk [vmem:[%s787] sm:$0xff] %vm309, %v871
        %873 = vst.msk [vmem:[%s762] sm:$0xff] %vm408, %v767
        %874 = vrot.lane.b32.xlu0 %v306, 104
        %v875 = vpop.permute.xlu0 %874
        %876 = vrot.lane.b32.xlu0 %v307, 104
        %v877 = vpop.permute.xlu0 %876
        %v878 = vsel %vm309, %v875, 0
        %v880 = vsel %vm309, %v877, 0
        %882 = vmatprep.subr.mxu0 0.0
        %883 = vmatpush1.xpose.msra.mxu0 0.0
        %884 = vmatprep.subr.mxu0 0.0
        %885 = vmatpush1.xpose.msra.mxu0 0.0
        %886 = vmatprep.subr.mxu0 0.0
        %887 = vmatpush1.xpose.msra.mxu0 0.0
        %888 = vmatprep.subr.mxu0 0.0
        %889 = vmatpush1.xpose.msra.mxu0 0.0
        %890 = vmatprep.subr.mxu0 0.0
        %891 = vmatpush1.xpose.msra.mxu0 0.0
        %892 = vmatprep.subr.mxu0 0.0
        %893 = vmatpush1.xpose.msra.mxu0 0.0
        %894 = vmatprep.subr.mxu0 0.0
        %895 = vmatpush1.xpose.msra.mxu0 0.0
        %896 = vmatprep.subr.mxu0 0.0
        %897 = vmatpush1.xpose.msra.mxu0 0.0
        %898 = vmatprep.subr.mxu0 0.0
        %899 = vmatpush1.xpose.msra.mxu0 0.0
        %900 = vmatprep.subr.mxu0 0.0
        %901 = vmatpush1.xpose.msra.mxu0 0.0
        %902 = vmatprep.subr.mxu0 0.0
        %903 = vmatpush1.xpose.msra.mxu0 0.0
        %904 = vmatprep.subr.mxu0 0.0
        %905 = vmatpush1.xpose.msra.mxu0 0.0
        %906 = vmatprep.subr.mxu0 0.0
        %907 = vmatpush1.xpose.msra.mxu0 0.0
        %908 = vmatprep.subr.mxu0 0.0
        %909 = vmatpush1.xpose.msra.mxu0 0.0
        %910 = vmatprep.subr.mxu0 0.0
        %911 = vmatpush1.xpose.msra.mxu0 0.0
        %912 = vmatprep.subr.mxu0 0.0
        %913 = vmatpush1.xpose.msra.mxu0 %v880
        %914 = vmatprep.subr.mxu0 0.0
        %915 = vmatpush2.xpose.msra.mxu0 0.0
        %916 = vmatprep.subr.mxu0 0.0
        %917 = vmatpush2.xpose.msra.mxu0 0.0
        %918 = vmatprep.subr.mxu0 0.0
        %919 = vmatpush2.xpose.msra.mxu0 0.0
        %920 = vmatprep.subr.mxu0 0.0
        %921 = vmatpush2.xpose.msra.mxu0 0.0
        %922 = vmatprep.subr.mxu0 0.0
        %923 = vmatpush2.xpose.msra.mxu0 0.0
        %924 = vmatprep.subr.mxu0 0.0
        %925 = vmatpush2.xpose.msra.mxu0 0.0
        %926 = vmatprep.subr.mxu0 0.0
        %927 = vmatpush2.xpose.msra.mxu0 0.0
        %928 = vmatprep.subr.mxu0 0.0
        %929 = vmatpush2.xpose.msra.mxu0 0.0
        %930 = vmatprep.subr.mxu0 0.0
        %931 = vmatpush2.xpose.msra.mxu0 0.0
        %932 = vmatprep.subr.mxu0 0.0
        %933 = vmatpush2.xpose.msra.mxu0 0.0
        %934 = vmatprep.subr.mxu0 0.0
        %935 = vmatpush2.xpose.msra.mxu0 0.0
        %936 = vmatprep.subr.mxu0 0.0
        %937 = vmatpush2.xpose.msra.mxu0 0.0
        %938 = vmatprep.subr.mxu0 0.0
        %939 = vmatpush2.xpose.msra.mxu0 0.0
        %940 = vmatprep.subr.mxu0 0.0
        %941 = vmatpush2.xpose.msra.mxu0 0.0
        %942 = vmatprep.subr.mxu0 0.0
        %943 = vmatpush2.xpose.msra.mxu0 0.0
        %944 = vmatprep.subr.mxu0 0.0
        %945 = vmatpush2.xpose.msra.mxu0 0.0
        %946 = vmatprep.mubr.f32.mxu0 0.0
        %947 = vmatmul.mubr.f32.gmra.mxu0 %v878
        %v948 = vpop.f32.mrf.mxu0
        %v949 = vadd.f32 0.0, %v948
        %v950 = vpop.f32.mrf.mxu0
        %951 = vdwg.mxu0
        %s952 = scalar_lea.vmem [#allocation2], 24
        %v953 = vld [vmem:[%s952] sm:$0xff]
        %v954 = vsel %vm309, %v949, -inf
        %955 = vmax.xlane.f32.xlu0 %v954
        %v956 = vpop.xlane.xlu0 %955
        %v957 = vmax.f32 %v953, %v956
        %v958 = vsub.f32 %v953, %v957
        %v959 = vmul.f32 %v958, 1.442695
        %v960 = vpow.pop %v959
        %962 = vset.pattern.permute.xlu0 0
        %963 = vperm.xlu0 %962, %v957
        %v964 = vpop.permute.xlu0 %963
        %v966 = vsub.f32 %v949, %v964
        %v967 = vmul.f32 %v966, 1.442695
        %v968 = vpow.pop %v967
        %s969 = scalar_lea.vmem [#allocation3], 24
        %v970 = vld [vmem:[%s969] sm:$0xff]
        %v971 = vmul.f32 %v960, %v970
        %v972 = vsel %vm309, %v968, 0.0
        %973 = vadd.xlane.f32.xlu0 %v972
        %v974 = vpop.xlane.xlu0 %973
        %v975 = vadd.f32 %v971, %v974
        %976 = vst.msk [vmem:[%s969] sm:$0xff] %vm408, %v975
        %s977 = scalar_lea.vmem [#allocation4], 24
        %v978 = vld [vmem:[%s977] sm:$0xff]
        %980 = vset.pattern.permute.xlu0 0
        %981 = vperm.xlu0 %980, %v960
        %v982 = vpop.permute.xlu0 %981
        %v984 = vmul.f32 %v982, %v978
        %985 = vrot.lane.b32.xlu0 %v308, 104
        %v986 = vpop.permute.xlu0 %985
        %v989 = vsel %vm309, %v968, 0
        %991 = vmatprep.subr.mxu0 0.0
        %992 = vmatpush1.msra.mxu0 0.0
        %993 = vmatprep.subr.mxu0 0.0
        %994 = vmatpush1.msra.mxu0 0.0
        %995 = vmatprep.subr.mxu0 0.0
        %996 = vmatpush1.msra.mxu0 0.0
        %997 = vmatprep.subr.mxu0 0.0
        %998 = vmatpush1.msra.mxu0 0.0
        %999 = vmatprep.subr.mxu0 0.0
        %1000 = vmatpush1.msra.mxu0 0.0
        %1001 = vmatprep.subr.mxu0 0.0
        %1002 = vmatpush1.msra.mxu0 0.0
        %1003 = vmatprep.subr.mxu0 0.0
        %1004 = vmatpush1.msra.mxu0 0.0
        %1005 = vmatprep.subr.mxu0 0.0
        %1006 = vmatpush1.msra.mxu0 0.0
        %1007 = vmatprep.subr.mxu0 0.0
        %1008 = vmatpush1.msra.mxu0 0.0
        %1009 = vmatprep.subr.mxu0 0.0
        %1010 = vmatpush1.msra.mxu0 0.0
        %1011 = vmatprep.subr.mxu0 0.0
        %1012 = vmatpush1.msra.mxu0 0.0
        %1013 = vmatprep.subr.mxu0 0.0
        %1014 = vmatpush1.msra.mxu0 0.0
        %1015 = vmatprep.subr.mxu0 0.0
        %1016 = vmatpush1.msra.mxu0 0.0
        %1017 = vmatprep.subr.mxu0 0.0
        %1018 = vmatpush1.msra.mxu0 0.0
        %1019 = vmatprep.subr.mxu0 0.0
        %1020 = vmatpush1.msra.mxu0 0.0
        %1021 = vmatprep.subr.mxu0 0.0
        %1022 = vmatpush1.msra.mxu0 %v986
        %1023 = vmatprep.subr.mxu0 0.0
        %1024 = vmatpush2.msra.mxu0 0.0
        %1025 = vmatprep.subr.mxu0 0.0
        %1026 = vmatpush2.msra.mxu0 0.0
        %1027 = vmatprep.subr.mxu0 0.0
        %1028 = vmatpush2.msra.mxu0 0.0
        %1029 = vmatprep.subr.mxu0 0.0
        %1030 = vmatpush2.msra.mxu0 0.0
        %1031 = vmatprep.subr.mxu0 0.0
        %1032 = vmatpush2.msra.mxu0 0.0
        %1033 = vmatprep.subr.mxu0 0.0
        %1034 = vmatpush2.msra.mxu0 0.0
        %1035 = vmatprep.subr.mxu0 0.0
        %1036 = vmatpush2.msra.mxu0 0.0
        %1037 = vmatprep.subr.mxu0 0.0
        %1038 = vmatpush2.msra.mxu0 0.0
        %1039 = vmatprep.subr.mxu0 0.0
        %1040 = vmatpush2.msra.mxu0 0.0
        %1041 = vmatprep.subr.mxu0 0.0
        %1042 = vmatpush2.msra.mxu0 0.0
        %1043 = vmatprep.subr.mxu0 0.0
        %1044 = vmatpush2.msra.mxu0 0.0
        %1045 = vmatprep.subr.mxu0 0.0
        %1046 = vmatpush2.msra.mxu0 0.0
        %1047 = vmatprep.subr.mxu0 0.0
        %1048 = vmatpush2.msra.mxu0 0.0
        %1049 = vmatprep.subr.mxu0 0.0
        %1050 = vmatpush2.msra.mxu0 0.0
        %1051 = vmatprep.subr.mxu0 0.0
        %1052 = vmatpush2.msra.mxu0 0.0
        %1053 = vmatprep.subr.mxu0 0.0
        %1054 = vmatpush2.msra.mxu0 0.0
        %1055 = vmatprep.mubr.f32.mxu0 0.0
        %1056 = vmatmul.mubr.f32.gmra.mxu0 %v989
        %v1057 = vpop.f32.mrf.mxu0
        %v1058 = vadd.f32 0.0, %v1057
        %v1059 = vpop.f32.mrf.mxu0
        %1060 = vdwg.mxu0
        %v1061 = vadd.f32 %v984, %v1058
        %1062 = vst.msk [vmem:[%s977] sm:$0xff] %vm309, %v1061
        %1063 = vst.msk [vmem:[%s952] sm:$0xff] %vm408, %v957
        // Predicated region
        $region49: #{tpu_custom_call.1} parent=31 // pred_check
          %p1064 = pneg %p287
        $region50: #{tpu_custom_call.1} parent=31 // pred_check_branch
          %1066 = sbr.rel (%p1064) target = $region52
        $region51: #{tpu_custom_call.1} parent=31 // pred_region
          %v1067 = vld [vmem:[#allocation3] sm:$0xff]
          %v1068 = vrcp.pop %v1067
          %v1069 = vld [vmem:[#allocation4] sm:$0xff]
          %1071 = vset.pattern.permute.xlu0 0
          %1072 = vperm.xlu0 %1071, %v1068
          %v1073 = vpop.permute.xlu0 %1072
          %v1075 = vmul.f32 %v1069, %v1073
          %1076 = vst.msk [vmem:[%s286] sm:$0xff] %vm309, %v1075
          %v1077 = vld [vmem:[%s588] sm:$0xff]
          %v1078 = vrcp.pop %v1077
          %v1079 = vld [vmem:[%s596] sm:$0xff]
          %1081 = vset.pattern.permute.xlu0 0
          %1082 = vperm.xlu0 %1081, %v1078
          %v1083 = vpop.permute.xlu0 %1082
          %v1085 = vmul.f32 %v1079, %v1083
          %1087 = vrot.lane.b32.xlu0 %v1085, 8
          %v1088 = vpop.permute.xlu0 %1087
          %vm1090 = vcmask 130112
          %1091 = vst.msk [vmem:[%s286] sm:$0xff] %vm1090, %v1088
          %v1092 = vld [vmem:[%s779] sm:$0xff]
          %v1093 = vrcp.pop %v1092
          %v1094 = vld [vmem:[%s787] sm:$0xff]
          %1096 = vset.pattern.permute.xlu0 0
          %1097 = vperm.xlu0 %1096, %v1093
          %v1098 = vpop.permute.xlu0 %1097
          %v1100 = vmul.f32 %v1094, %v1098
          %1102 = vrot.lane.b32.xlu0 %v1100, 16
          %v1103 = vpop.permute.xlu0 %1102
          %vm1105 = vcmask 195712
          %1106 = vst.msk [vmem:[%s286] sm:$0xff] %vm1105, %v1103
          %v1107 = vld [vmem:[%s969] sm:$0xff]
          %v1108 = vrcp.pop %v1107
          %v1109 = vld [vmem:[%s977] sm:$0xff]
          %1111 = vset.pattern.permute.xlu0 0
          %1112 = vperm.xlu0 %1111, %v1108
          %v1113 = vpop.permute.xlu0 %1112
          %v1115 = vmul.f32 %v1109, %v1113
          %1117 = vrot.lane.b32.xlu0 %v1115, 24
          %v1118 = vpop.permute.xlu0 %1117
          %vm1120 = vcmask 261312
          %1121 = vst.msk [vmem:[%s286] sm:$0xff] %vm1120, %v1118
        $region52: #{tpu_custom_call.1} parent=31 // pred_fallthru
          _
        %s1122 = sand.u32 %s136, 1
        %s1123 = scalar_lea.sflag [#allocation7], %s1122
        %s1124 = sand.u32 %s136, 1
        %s1125 = smul.addr %s1124, 8
        %s1126 = scalar_lea.vmem [#allocation11], %s1125
        // Predicated region
        $region53: #{tpu_custom_call.1} parent=31 // pred_check
          %p1127 = pneg %p146
        $region54: #{tpu_custom_call.1} parent=31 // pred_check_branch
          %1129 = sbr.rel (%p1127) target = $region56
        $region55: #{tpu_custom_call.1} parent=31 // pred_region
          %s1131 = ssub.s32 128, 128
          %1132 = vsyncadd %s1123, %s1131
          %s1133 = sadd.s32 %s29, %s28
          %s1134 = smul.addr %s1133, 128
          %s1135 = scalar_lea.hbm %s3, %s1134
          %s1137 = sshll.u32 %s1126, 4
          %s1138 = int_to_ptr.vmem [resolvable:$true] %s1137
          %1140 = dma.vmem_to_hbm [thread:$0]  %s1138, 128, %s1135, %s1123
        $region56: #{tpu_custom_call.1} parent=31 // pred_fallthru
          _
      $region32: #{tpu_custom_call.1} parent=5 // pred_fallthru
        _
      %p1141 = scmp.le.s32.totalorder 2, %s18
      // Predicated region
      $region57: #{tpu_custom_call.1} parent=5 // pred_check
        %p1142 = pneg %p1141
      $region58: #{tpu_custom_call.1} parent=5 // pred_check_branch
        %1144 = sbr.rel (%p1142) target = $region60
      $region59: #{tpu_custom_call.1} parent=5 // pred_region
        %s1145 = ssub.s32 %s18, 2
        // Predicated region
        $region61: #{tpu_custom_call.1} parent=59 // pred_check
          %p1146 = pneg %p152
        $region62: #{tpu_custom_call.1} parent=59 // pred_check_branch
          %1148 = sbr.rel (%p1146) target = $region64
        $region63: #{tpu_custom_call.1} parent=59 // pred_region
          %s1149 = sand.u32 %s137, 1
          %s1150 = scalar_lea.sflag [#allocation7], %s1149
          %s1151 = sand.u32 %s137, 1
          %s1152 = smul.addr %s1151, 8
          %s1153 = scalar_lea.vmem [#allocation11], %s1152
          %1154 = dma.done %s1150, 128
        $region64: #{tpu_custom_call.1} parent=59 // pred_fallthru
          _
      $region60: #{tpu_custom_call.1} parent=5 // pred_fallthru
        _
    $region6: #{tpu_custom_call.1} parent=1 // loop_footer
      %s22 = sadd.s32 1, %s18
    $region7: #{tpu_custom_call.1} parent=1 // loop_footer_branch
      %17 = sbr.rel target = $region3
    $region8: #{tpu_custom_call.1} parent=1 // loop_exit
      _
    %1155 = vsyncpa [#allocation6], 1
    %s1156 = scalar_lea.sflag [#allocation6], 1
    %1157 = vsyncpa %s1156, 1
    %1158 = vsyncpa [#allocation9], 1
    %s1159 = scalar_lea.sflag [#allocation9], 1
    %1160 = vsyncpa %s1159, 1
    %1161 = vsyncpa [#allocation7], 1
    %s1162 = scalar_lea.sflag [#allocation7], 1
    %1163 = vsyncpa %s1162, 1

</llo_original>
